<compile_context>
chip_gen: v6e
topology: v6e:2x2x1
jax: 0.10.0
libtpu: 0.0.40
codegen_flags: <defaults>
</compile_context>

<pallas_src>
import functools

import jax
import jax.numpy as jnp
from jax.experimental import pallas as pl
from jax.experimental.pallas import tpu as pltpu

K = 7            # conv kernel size
P = K // 2       # padding = 3

# Per-operand VMEM budget for a single pipeline buffer (double-buffering x2).
_REDUCE_BLOCK_BUDGET = 2 << 20   # bytes, pass-1 x block
_APPLY_BLOCK_BUDGET = 1 << 20    # bytes, pass-2 x / out blocks


def _round_up(x, m):
    return (x + m - 1) // m * m


def _largest_divisor_leq(n, cap):
    cap = max(1, min(n, cap))
    for t in range(cap, 0, -1):
        if n % t == 0:
            return t
    return 1


def _apply_c_tile(c, cap):
    # Apply-phase blocks are (1, c_tile, H*W): c_tile sits on the sublane axis,
    # so it must be a multiple of 8 or equal to the full channel dimension.
    if c <= cap:
        return c
    best = 0
    t = 8
    while t <= min(c, cap):
        if c % t == 0:
            best = t
        t += 8
    return best if best else c


# ----------------------------------------------------------------------------
# Pass 1: channel mean/max + 7x7 conv + sigmoid -> attention map (N, H, W)
# ----------------------------------------------------------------------------
def _reduce_conv_kernel(w_ref, x_ref, attn_ref, sum_sc, max_sc, pad_sc,
                        *, C, c_tile, H, W, HPAD, WPAD):
    # w_ref   : SMEM (2*K*K,) f32        -- conv1 weights, flattened [ci, kh, kw]
    # x_ref   : VMEM (1, c_tile, H, W)   -- one C-chunk of one batch element
    # attn_ref: VMEM (1, H, W) f32       -- per-batch attention map (output)
    # sum_sc  : VMEM (H, W) f32          -- running channel sum
    # max_sc  : VMEM (H, W) f32          -- running channel max
    # pad_sc  : VMEM (2, HPAD, WPAD) f32 -- aligned, zero-padded [avg, max] maps
    ct = pl.program_id(1)
    nct = pl.num_programs(1)

    @pl.when(ct == 0)
    def _init():
        sum_sc[...] = jnp.zeros((H, W), jnp.float32)
        max_sc[...] = jnp.full((H, W), -jnp.inf, jnp.float32)

    # Stream the channels of this C-tile; keeps live ranges tiny.
    @pl.loop(0, c_tile)
    def _accumulate(c):
        plane = x_ref[0, c].astype(jnp.float32)          # (H, W)
        sum_sc[...] = sum_sc[...] + plane
        max_sc[...] = jnp.maximum(max_sc[...], plane)

    @pl.when(ct == nct - 1)
    def _conv_and_sigmoid():
        # Aligned padded planes: zero the scratch once, then write the interior
        # (replaces the two jnp.pad temporaries of the previous version).
        pad_sc[...] = jnp.zeros((2, HPAD, WPAD), jnp.float32)
        pad_sc[0, P:P + H, P:P + W] = sum_sc[...] * (1.0 / C)   # avg plane
        pad_sc[1, P:P + H, P:P + W] = max_sc[...]               # max plane

        # 7x7 conv as shifted-window MACs. The kw (lane) shift is hoisted out
        # of the kh loop: one lane shift per (ci, kw) reused by 7 kh taps.
        acc = jnp.zeros((H, W), jnp.float32)
        for ci in range(2):
            plane = pad_sc[ci]                            # (HPAD, WPAD)
            for kw in range(K):
                col = plane[:, kw:kw + W]                 # (HPAD, W) lane shift
                for kh in range(K):
                    wv = w_ref[ci * K * K + kh * K + kw]  # scalar from SMEM
                    acc = acc + wv * col[kh:kh + H, :]

        attn_ref[0] = jax.nn.sigmoid(acc)


# ----------------------------------------------------------------------------
# Pass 2: lane-dense elementwise apply  out = x * attn  (broadcast over C)
# ----------------------------------------------------------------------------
def _apply_kernel(x_ref, attn_ref, o_ref):
    # x_ref   : VMEM (1, c_tile, HW)
    # attn_ref: VMEM (1, 1, HW) f32
    # o_ref   : VMEM (1, c_tile, HW)
    o_ref[...] = (x_ref[...].astype(jnp.float32) * attn_ref[...]).astype(o_ref.dtype)


def spatial_attention(x, conv_w):
    """x: (N, C, H, W); conv_w: (1, 2, K, K) Conv2d weight (no bias)."""
    N, C, H, W = x.shape
    HW = H * W
    HPAD = _round_up(H + 2 * P, 8)
    WPAD = _round_up(W + 2 * P, 128)
    itemsize = x.dtype.itemsize
    w_flat = conv_w.reshape(-1).astype(jnp.float32)              # (2*K*K,)

    # ---------------- pass 1: attention map ----------------
    c_tile_a = _largest_divisor_leq(
        C, _REDUCE_BLOCK_BUDGET // max(1, H * W * itemsize))
    nct_a = C // c_tile_a
    reduce_kernel = functools.partial(
        _reduce_conv_kernel, C=C, c_tile=c_tile_a, H=H, W=W, HPAD=HPAD, WPAD=WPAD)

    attn = pl.pallas_call(
        reduce_kernel,
        out_shape=jax.ShapeDtypeStruct((N, H, W), jnp.float32),
        grid_spec=pltpu.PrefetchScalarGridSpec(
            num_scalar_prefetch=0,
            grid=(N, nct_a),
            in_specs=[
                pl.BlockSpec(memory_space=pltpu.MemorySpace.SMEM),       # weights
                pl.BlockSpec((1, c_tile_a, H, W), lambda n, c: (n, c, 0, 0)),
            ],
            out_specs=pl.BlockSpec((1, H, W), lambda n, c: (n, 0, 0)),
            scratch_shapes=[
                pltpu.VMEM((H, W), jnp.float32),            # running sum
                pltpu.VMEM((H, W), jnp.float32),            # running max
                pltpu.VMEM((2, HPAD, WPAD), jnp.float32),   # padded avg/max maps
            ],
        ),
        compiler_params=pltpu.CompilerParams(
            dimension_semantics=("parallel", "arbitrary")),
        cost_estimate=pl.CostEstimate(
            flops=int(N * (2 * C * HW + 2 * 2 * K * K * HW)),
            transcendentals=int(N * HW),
            bytes_accessed=int(N * C * HW * itemsize + N * HW * 4 + 2 * K * K * 4)),
    )(w_flat, x)

    # ---------------- pass 2: lane-dense apply ----------------
    x_flat = x.reshape(N, C, HW)          # free bitcast (merge minor dims)
    attn_flat = attn.reshape(N, 1, HW)    # free bitcast
    c_tile_b = _apply_c_tile(C, _APPLY_BLOCK_BUDGET // max(1, HW * itemsize))
    nct_b = C // c_tile_b

    out_flat = pl.pallas_call(
        _apply_kernel,
        out_shape=jax.ShapeDtypeStruct((N, C, HW), x.dtype),
        grid_spec=pltpu.PrefetchScalarGridSpec(
            num_scalar_prefetch=0,
            grid=(N, nct_b),
            in_specs=[
                pl.BlockSpec((1, c_tile_b, HW), lambda n, c: (n, c, 0)),
                pl.BlockSpec((1, 1, HW), lambda n, c: (n, 0, 0)),
            ],
            out_specs=pl.BlockSpec((1, c_tile_b, HW), lambda n, c: (n, c, 0)),
        ),
        compiler_params=pltpu.CompilerParams(
            dimension_semantics=("parallel", "parallel")),
        cost_estimate=pl.CostEstimate(
            flops=int(N * C * HW),
            transcendentals=0,
            bytes_accessed=int(2 * N * C * HW * itemsize + N * HW * 4)),
    )(x_flat, attn_flat)

    return out_flat.reshape(N, C, H, W)


def _reference(x, conv_w):
    """Pure-JAX reference matching the PyTorch forward exactly."""
    avg = jnp.mean(x, axis=1, keepdims=True)
    mx = jnp.max(x, axis=1, keepdims=True)
    x_cat = jnp.concatenate([avg, mx], axis=1)
    out = jax.lax.conv_general_dilated(
        x_cat, conv_w,
        window_strides=(1, 1),
        padding=[(P, P), (P, P)],
        dimension_numbers=("NCHW", "OIHW", "NCHW"),
    )
    return x * jax.nn.sigmoid(out)


if __name__ == "__main__":
    key = jax.random.PRNGKey(0)
    kx, kw_key = jax.random.split(key)

    N, C, H, W = 2, 4, 16, 16
    x = jax.random.normal(kx, (N, C, H, W), dtype=jnp.float32)

    # Deterministic conv1 weight init: shape (out=1, in=2, K, K), no bias
    # (uniform in [-b, b], b = 1/sqrt(fan_in), like PyTorch's default scheme).
    bound = 1.0 / jnp.sqrt(2.0 * K * K)
    conv_w = jax.random.uniform(
        kw_key, (1, 2, K, K), minval=-bound, maxval=bound, dtype=jnp.float32)

    out = spatial_attention(x, conv_w)
    out = jax.block_until_ready(out)

    ref = _reference(x, conv_w)
    assert out.shape == (N, C, H, W)
    assert jnp.allclose(out, ref, atol=1e-5, rtol=1e-5), "mismatch vs reference"

    print("KERNEL_OK")
</pallas_src>

<mosaic_0001>
module attributes {stable_mosaic.version = 11 : i64} {
  func.func @_reduce_conv_kernel(%arg0: i32, %arg1: i32, %arg2: memref<98xf32, #tpu.memory_space<smem>>, %arg3: memref<1x4x16x16xf32, #tpu.memory_space<vmem>>, %arg4: memref<1x16x16xf32, #tpu.memory_space<vmem>>, %arg5: memref<16x16xf32, #tpu.memory_space<vmem>>, %arg6: memref<16x16xf32, #tpu.memory_space<vmem>>, %arg7: memref<2x24x128xf32, #tpu.memory_space<vmem>>) attributes {dimension_semantics = [#tpu.dimension_semantics<parallel>, #tpu.dimension_semantics<arbitrary>], iteration_bounds = array<i64: 2, 1>, scalar_prefetch = 0 : i64, scratch_operands = 3 : i64, tpu.core_type = #tpu.core_type<tc>, window_params = [{transform_indices = @transform_0, window_bounds = array<i64: 98>}, {transform_indices = @transform_1, window_bounds = array<i64: 1, 4, 16, 16>}, {transform_indices = @transform_2, window_bounds = array<i64: 1, 16, 16>}]} {
    %c0_i32 = arith.constant 0 : i32
    %0 = arith.cmpi eq, %arg1, %c0_i32 : i32
    %1 = arith.extui %0 : i1 to i32
    %c0_i32_0 = arith.constant 0 : i32
    %2 = arith.cmpi ne, %1, %c0_i32_0 : i32
    scf.if %2 {
      %cst = arith.constant 0.000000e+00 : f32
      %7 = vector.broadcast %cst : f32 to vector<16x16xf32>
      %c0 = arith.constant 0 : index
      %c0_5 = arith.constant 0 : index
      %8 = vector.load %arg5[%c0, %c0_5] : memref<16x16xf32, #tpu.memory_space<vmem>>, vector<16x16xf32>
      tpu.vector_store %arg5[%c0, %c0_5], %7 {strides = array<i32>} : memref<16x16xf32, #tpu.memory_space<vmem>>, vector<16x16xf32>,
      %cst_6 = arith.constant 0xFF800000 : f32
      %9 = vector.broadcast %cst_6 : f32 to vector<16x16xf32>
      %c0_7 = arith.constant 0 : index
      %c0_8 = arith.constant 0 : index
      %10 = vector.load %arg6[%c0_7, %c0_8] : memref<16x16xf32, #tpu.memory_space<vmem>>, vector<16x16xf32>
      tpu.vector_store %arg6[%c0_7, %c0_8], %9 {strides = array<i32>} : memref<16x16xf32, #tpu.memory_space<vmem>>, vector<16x16xf32>,
    } else {
    }
    %c0_i32_1 = arith.constant 0 : i32
    %c4_i32 = arith.constant 4 : i32
    %3 = arith.addi %c0_i32_1, %c4_i32 : i32
    %c1_i32 = arith.constant 1 : i32
    scf.for %arg8 = %c0_i32_1 to %3 step %c1_i32  : i32 {
      %c1_i32_5 = arith.constant 1 : i32
      %7 = arith.muli %arg8, %c1_i32_5 : i32
      %c0_i32_6 = arith.constant 0 : i32
      %8 = arith.addi %c0_i32_6, %7 : i32
      %c0 = arith.constant 0 : index
      %9 = arith.index_cast %8 : i32 to index
      %c0_7 = arith.constant 0 : index
      %c0_8 = arith.constant 0 : index
      %10 = vector.load %arg3[%c0, %9, %c0_7, %c0_8] : memref<1x4x16x16xf32, #tpu.memory_space<vmem>>, vector<1x1x16x16xf32>
      %11 = vector.shape_cast %10 : vector<1x1x16x16xf32> to vector<16x16xf32>
      %c0_9 = arith.constant 0 : index
      %c0_10 = arith.constant 0 : index
      %12 = vector.load %arg5[%c0_9, %c0_10] : memref<16x16xf32, #tpu.memory_space<vmem>>, vector<16x16xf32>
      %13 = arith.addf %12, %11 : vector<16x16xf32>
      %c0_11 = arith.constant 0 : index
      %c0_12 = arith.constant 0 : index
      %14 = vector.load %arg5[%c0_11, %c0_12] : memref<16x16xf32, #tpu.memory_space<vmem>>, vector<16x16xf32>
      tpu.vector_store %arg5[%c0_11, %c0_12], %13 {strides = array<i32>} : memref<16x16xf32, #tpu.memory_space<vmem>>, vector<16x16xf32>,
      %c0_13 = arith.constant 0 : index
      %c0_14 = arith.constant 0 : index
      %15 = vector.load %arg6[%c0_13, %c0_14] : memref<16x16xf32, #tpu.memory_space<vmem>>, vector<16x16xf32>
      %16 = arith.maximumf %15, %11 : vector<16x16xf32>
      %c0_15 = arith.constant 0 : index
      %c0_16 = arith.constant 0 : index
      %17 = vector.load %arg6[%c0_15, %c0_16] : memref<16x16xf32, #tpu.memory_space<vmem>>, vector<16x16xf32>
      tpu.vector_store %arg6[%c0_15, %c0_16], %16 {strides = array<i32>} : memref<16x16xf32, #tpu.memory_space<vmem>>, vector<16x16xf32>,
    }
    %c4_i32_2 = arith.constant 4 : i32
    %c0_i32_3 = arith.constant 0 : i32
    %4 = arith.cmpi eq, %arg1, %c0_i32_3 : i32
    %5 = arith.extui %4 : i1 to i32
    %c0_i32_4 = arith.constant 0 : i32
    %6 = arith.cmpi ne, %5, %c0_i32_4 : i32
    scf.if %6 {
      %cst = arith.constant 0.000000e+00 : f32
      %7 = vector.broadcast %cst : f32 to vector<2x24x128xf32>
      %c0 = arith.constant 0 : index
      %c0_5 = arith.constant 0 : index
      %c0_6 = arith.constant 0 : index
      %8 = vector.load %arg7[%c0, %c0_5, %c0_6] : memref<2x24x128xf32, #tpu.memory_space<vmem>>, vector<2x24x128xf32>
      tpu.vector_store %arg7[%c0, %c0_5, %c0_6], %7 {strides = array<i32>} : memref<2x24x128xf32, #tpu.memory_space<vmem>>, vector<2x24x128xf32>,
      %c0_7 = arith.constant 0 : index
      %c0_8 = arith.constant 0 : index
      %9 = vector.load %arg5[%c0_7, %c0_8] : memref<16x16xf32, #tpu.memory_space<vmem>>, vector<16x16xf32>
      %cst_9 = arith.constant 2.500000e-01 : f32
      %10 = vector.broadcast %cst_9 : f32 to vector<16x16xf32>
      %11 = arith.mulf %9, %10 : vector<16x16xf32>
      %c0_10 = arith.constant 0 : index
      %c3 = arith.constant 3 : index
      %c3_11 = arith.constant 3 : index
      %12 = vector.load %arg7[%c0_10, %c3, %c3_11] : memref<2x24x128xf32, #tpu.memory_space<vmem>>, vector<1x16x16xf32>
      %13 = vector.shape_cast %12 : vector<1x16x16xf32> to vector<16x16xf32>
      %14 = vector.shape_cast %11 : vector<16x16xf32> to vector<1x16x16xf32>
      tpu.vector_store %arg7[%c0_10, %c3, %c3_11], %14 {strides = array<i32>} : memref<2x24x128xf32, #tpu.memory_space<vmem>>, vector<1x16x16xf32>,
      %c0_12 = arith.constant 0 : index
      %c0_13 = arith.constant 0 : index
      %15 = vector.load %arg6[%c0_12, %c0_13] : memref<16x16xf32, #tpu.memory_space<vmem>>, vector<16x16xf32>
      %c1 = arith.constant 1 : index
      %c3_14 = arith.constant 3 : index
      %c3_15 = arith.constant 3 : index
      %16 = vector.load %arg7[%c1, %c3_14, %c3_15] : memref<2x24x128xf32, #tpu.memory_space<vmem>>, vector<1x16x16xf32>
      %17 = vector.shape_cast %16 : vector<1x16x16xf32> to vector<16x16xf32>
      %18 = vector.shape_cast %15 : vector<16x16xf32> to vector<1x16x16xf32>
      tpu.vector_store %arg7[%c1, %c3_14, %c3_15], %18 {strides = array<i32>} : memref<2x24x128xf32, #tpu.memory_space<vmem>>, vector<1x16x16xf32>,
      %cst_16 = arith.constant 0.000000e+00 : f32
      %19 = vector.broadcast %cst_16 : f32 to vector<16x16xf32>
      %c0_17 = arith.constant 0 : index
      %c0_18 = arith.constant 0 : index
      %c0_19 = arith.constant 0 : index
      %20 = vector.load %arg7[%c0_17, %c0_18, %c0_19] : memref<2x24x128xf32, #tpu.memory_space<vmem>>, vector<1x24x128xf32>
      %21 = vector.shape_cast %20 : vector<1x24x128xf32> to vector<24x128xf32>
      %22 = vector.extract_strided_slice %21 {offsets = [0, 0], sizes = [24, 16], strides = [1, 1]} : vector<24x128xf32> to vector<24x16xf32>
      %c0_20 = arith.constant 0 : index
      %23 = memref.load %arg2[%c0_20] : memref<98xf32, #tpu.memory_space<smem>>
      %24 = vector.extract_strided_slice %22 {offsets = [0, 0], sizes = [16, 16], strides = [1, 1]} : vector<24x16xf32> to vector<16x16xf32>
      %25 = vector.broadcast %23 : f32 to vector<16x16xf32>
      %26 = arith.mulf %25, %24 : vector<16x16xf32>
      %27 = arith.addf %19, %26 : vector<16x16xf32>
      %c7 = arith.constant 7 : index
      %28 = memref.load %arg2[%c7] : memref<98xf32, #tpu.memory_space<smem>>
      %29 = vector.extract_strided_slice %22 {offsets = [1, 0], sizes = [16, 16], strides = [1, 1]} : vector<24x16xf32> to vector<16x16xf32>
      %30 = vector.broadcast %28 : f32 to vector<16x16xf32>
      %31 = arith.mulf %30, %29 : vector<16x16xf32>
      %32 = arith.addf %27, %31 : vector<16x16xf32>
      %c14 = arith.constant 14 : index
      %33 = memref.load %arg2[%c14] : memref<98xf32, #tpu.memory_space<smem>>
      %34 = vector.extract_strided_slice %22 {offsets = [2, 0], sizes = [16, 16], strides = [1, 1]} : vector<24x16xf32> to vector<16x16xf32>
      %35 = vector.broadcast %33 : f32 to vector<16x16xf32>
      %36 = arith.mulf %35, %34 : vector<16x16xf32>
      %37 = arith.addf %32, %36 : vector<16x16xf32>
      %c21 = arith.constant 21 : index
      %38 = memref.load %arg2[%c21] : memref<98xf32, #tpu.memory_space<smem>>
      %39 = vector.extract_strided_slice %22 {offsets = [3, 0], sizes = [16, 16], strides = [1, 1]} : vector<24x16xf32> to vector<16x16xf32>
      %40 = vector.broadcast %38 : f32 to vector<16x16xf32>
      %41 = arith.mulf %40, %39 : vector<16x16xf32>
      %42 = arith.addf %37, %41 : vector<16x16xf32>
      %c28 = arith.constant 28 : index
      %43 = memref.load %arg2[%c28] : memref<98xf32, #tpu.memory_space<smem>>
      %44 = vector.extract_strided_slice %22 {offsets = [4, 0], sizes = [16, 16], strides = [1, 1]} : vector<24x16xf32> to vector<16x16xf32>
      %45 = vector.broadcast %43 : f32 to vector<16x16xf32>
      %46 = arith.mulf %45, %44 : vector<16x16xf32>
      %47 = arith.addf %42, %46 : vector<16x16xf32>
      %c35 = arith.constant 35 : index
      %48 = memref.load %arg2[%c35] : memref<98xf32, #tpu.memory_space<smem>>
      %49 = vector.extract_strided_slice %22 {offsets = [5, 0], sizes = [16, 16], strides = [1, 1]} : vector<24x16xf32> to vector<16x16xf32>
      %50 = vector.broadcast %48 : f32 to vector<16x16xf32>
      %51 = arith.mulf %50, %49 : vector<16x16xf32>
      %52 = arith.addf %47, %51 : vector<16x16xf32>
      %c42 = arith.constant 42 : index
      %53 = memref.load %arg2[%c42] : memref<98xf32, #tpu.memory_space<smem>>
      %54 = vector.extract_strided_slice %22 {offsets = [6, 0], sizes = [16, 16], strides = [1, 1]} : vector<24x16xf32> to vector<16x16xf32>
      %55 = vector.broadcast %53 : f32 to vector<16x16xf32>
      %56 = arith.mulf %55, %54 : vector<16x16xf32>
      %57 = arith.addf %52, %56 : vector<16x16xf32>
      %58 = vector.extract_strided_slice %21 {offsets = [0, 1], sizes = [24, 16], strides = [1, 1]} : vector<24x128xf32> to vector<24x16xf32>
      %c1_21 = arith.constant 1 : index
      %59 = memref.load %arg2[%c1_21] : memref<98xf32, #tpu.memory_space<smem>>
      %60 = vector.extract_strided_slice %58 {offsets = [0, 0], sizes = [16, 16], strides = [1, 1]} : vector<24x16xf32> to vector<16x16xf32>
      %61 = vector.broadcast %59 : f32 to vector<16x16xf32>
      %62 = arith.mulf %61, %60 : vector<16x16xf32>
      %63 = arith.addf %57, %62 : vector<16x16xf32>
      %c8 = arith.constant 8 : index
      %64 = memref.load %arg2[%c8] : memref<98xf32, #tpu.memory_space<smem>>
      %65 = vector.extract_strided_slice %58 {offsets = [1, 0], sizes = [16, 16], strides = [1, 1]} : vector<24x16xf32> to vector<16x16xf32>
      %66 = vector.broadcast %64 : f32 to vector<16x16xf32>
      %67 = arith.mulf %66, %65 : vector<16x16xf32>
      %68 = arith.addf %63, %67 : vector<16x16xf32>
      %c15 = arith.constant 15 : index
      %69 = memref.load %arg2[%c15] : memref<98xf32, #tpu.memory_space<smem>>
      %70 = vector.extract_strided_slice %58 {offsets = [2, 0], sizes = [16, 16], strides = [1, 1]} : vector<24x16xf32> to vector<16x16xf32>
      %71 = vector.broadcast %69 : f32 to vector<16x16xf32>
      %72 = arith.mulf %71, %70 : vector<16x16xf32>
      %73 = arith.addf %68, %72 : vector<16x16xf32>
      %c22 = arith.constant 22 : index
      %74 = memref.load %arg2[%c22] : memref<98xf32, #tpu.memory_space<smem>>
      %75 = vector.extract_strided_slice %58 {offsets = [3, 0], sizes = [16, 16], strides = [1, 1]} : vector<24x16xf32> to vector<16x16xf32>
      %76 = vector.broadcast %74 : f32 to vector<16x16xf32>
      %77 = arith.mulf %76, %75 : vector<16x16xf32>
      %78 = arith.addf %73, %77 : vector<16x16xf32>
      %c29 = arith.constant 29 : index
      %79 = memref.load %arg2[%c29] : memref<98xf32, #tpu.memory_space<smem>>
      %80 = vector.extract_strided_slice %58 {offsets = [4, 0], sizes = [16, 16], strides = [1, 1]} : vector<24x16xf32> to vector<16x16xf32>
      %81 = vector.broadcast %79 : f32 to vector<16x16xf32>
      %82 = arith.mulf %81, %80 : vector<16x16xf32>
      %83 = arith.addf %78, %82 : vector<16x16xf32>
      %c36 = arith.constant 36 : index
      %84 = memref.load %arg2[%c36] : memref<98xf32, #tpu.memory_space<smem>>
      %85 = vector.extract_strided_slice %58 {offsets = [5, 0], sizes = [16, 16], strides = [1, 1]} : vector<24x16xf32> to vector<16x16xf32>
      %86 = vector.broadcast %84 : f32 to vector<16x16xf32>
      %87 = arith.mulf %86, %85 : vector<16x16xf32>
      %88 = arith.addf %83, %87 : vector<16x16xf32>
      %c43 = arith.constant 43 : index
      %89 = memref.load %arg2[%c43] : memref<98xf32, #tpu.memory_space<smem>>
      %90 = vector.extract_strided_slice %58 {offsets = [6, 0], sizes = [16, 16], strides = [1, 1]} : vector<24x16xf32> to vector<16x16xf32>
      %91 = vector.broadcast %89 : f32 to vector<16x16xf32>
      %92 = arith.mulf %91, %90 : vector<16x16xf32>
      %93 = arith.addf %88, %92 : vector<16x16xf32>
      %94 = vector.extract_strided_slice %21 {offsets = [0, 2], sizes = [24, 16], strides = [1, 1]} : vector<24x128xf32> to vector<24x16xf32>
      %c2 = arith.constant 2 : index
      %95 = memref.load %arg2[%c2] : memref<98xf32, #tpu.memory_space<smem>>
      %96 = vector.extract_strided_slice %94 {offsets = [0, 0], sizes = [16, 16], strides = [1, 1]} : vector<24x16xf32> to vector<16x16xf32>
      %97 = vector.broadcast %95 : f32 to vector<16x16xf32>
      %98 = arith.mulf %97, %96 : vector<16x16xf32>
      %99 = arith.addf %93, %98 : vector<16x16xf32>
      %c9 = arith.constant 9 : index
      %100 = memref.load %arg2[%c9] : memref<98xf32, #tpu.memory_space<smem>>
      %101 = vector.extract_strided_slice %94 {offsets = [1, 0], sizes = [16, 16], strides = [1, 1]} : vector<24x16xf32> to vector<16x16xf32>
      %102 = vector.broadcast %100 : f32 to vector<16x16xf32>
      %103 = arith.mulf %102, %101 : vector<16x16xf32>
      %104 = arith.addf %99, %103 : vector<16x16xf32>
      %c16 = arith.constant 16 : index
      %105 = memref.load %arg2[%c16] : memref<98xf32, #tpu.memory_space<smem>>
      %106 = vector.extract_strided_slice %94 {offsets = [2, 0], sizes = [16, 16], strides = [1, 1]} : vector<24x16xf32> to vector<16x16xf32>
      %107 = vector.broadcast %105 : f32 to vector<16x16xf32>
      %108 = arith.mulf %107, %106 : vector<16x16xf32>
      %109 = arith.addf %104, %108 : vector<16x16xf32>
      %c23 = arith.constant 23 : index
      %110 = memref.load %arg2[%c23] : memref<98xf32, #tpu.memory_space<smem>>
      %111 = vector.extract_strided_slice %94 {offsets = [3, 0], sizes = [16, 16], strides = [1, 1]} : vector<24x16xf32> to vector<16x16xf32>
      %112 = vector.broadcast %110 : f32 to vector<16x16xf32>
      %113 = arith.mulf %112, %111 : vector<16x16xf32>
      %114 = arith.addf %109, %113 : vector<16x16xf32>
      %c30 = arith.constant 30 : index
      %115 = memref.load %arg2[%c30] : memref<98xf32, #tpu.memory_space<smem>>
      %116 = vector.extract_strided_slice %94 {offsets = [4, 0], sizes = [16, 16], strides = [1, 1]} : vector<24x16xf32> to vector<16x16xf32>
      %117 = vector.broadcast %115 : f32 to vector<16x16xf32>
      %118 = arith.mulf %117, %116 : vector<16x16xf32>
      %119 = arith.addf %114, %118 : vector<16x16xf32>
      %c37 = arith.constant 37 : index
      %120 = memref.load %arg2[%c37] : memref<98xf32, #tpu.memory_space<smem>>
      %121 = vector.extract_strided_slice %94 {offsets = [5, 0], sizes = [16, 16], strides = [1, 1]} : vector<24x16xf32> to vector<16x16xf32>
      %122 = vector.broadcast %120 : f32 to vector<16x16xf32>
      %123 = arith.mulf %122, %121 : vector<16x16xf32>
      %124 = arith.addf %119, %123 : vector<16x16xf32>
      %c44 = arith.constant 44 : index
      %125 = memref.load %arg2[%c44] : memref<98xf32, #tpu.memory_space<smem>>
      %126 = vector.extract_strided_slice %94 {offsets = [6, 0], sizes = [16, 16], strides = [1, 1]} : vector<24x16xf32> to vector<16x16xf32>
      %127 = vector.broadcast %125 : f32 to vector<16x16xf32>
      %128 = arith.mulf %127, %126 : vector<16x16xf32>
      %129 = arith.addf %124, %128 : vector<16x16xf32>
      %130 = vector.extract_strided_slice %21 {offsets = [0, 3], sizes = [24, 16], strides = [1, 1]} : vector<24x128xf32> to vector<24x16xf32>
      %c3_22 = arith.constant 3 : index
      %131 = memref.load %arg2[%c3_22] : memref<98xf32, #tpu.memory_space<smem>>
      %132 = vector.extract_strided_slice %130 {offsets = [0, 0], sizes = [16, 16], strides = [1, 1]} : vector<24x16xf32> to vector<16x16xf32>
      %133 = vector.broadcast %131 : f32 to vector<16x16xf32>
      %134 = arith.mulf %133, %132 : vector<16x16xf32>
      %135 = arith.addf %129, %134 : vector<16x16xf32>
      %c10 = arith.constant 10 : index
      %136 = memref.load %arg2[%c10] : memref<98xf32, #tpu.memory_space<smem>>
      %137 = vector.extract_strided_slice %130 {offsets = [1, 0], sizes = [16, 16], strides = [1, 1]} : vector<24x16xf32> to vector<16x16xf32>
      %138 = vector.broadcast %136 : f32 to vector<16x16xf32>
      %139 = arith.mulf %138, %137 : vector<16x16xf32>
      %140 = arith.addf %135, %139 : vector<16x16xf32>
      %c17 = arith.constant 17 : index
      %141 = memref.load %arg2[%c17] : memref<98xf32, #tpu.memory_space<smem>>
      %142 = vector.extract_strided_slice %130 {offsets = [2, 0], sizes = [16, 16], strides = [1, 1]} : vector<24x16xf32> to vector<16x16xf32>
      %143 = vector.broadcast %141 : f32 to vector<16x16xf32>
      %144 = arith.mulf %143, %142 : vector<16x16xf32>
      %145 = arith.addf %140, %144 : vector<16x16xf32>
      %c24 = arith.constant 24 : index
      %146 = memref.load %arg2[%c24] : memref<98xf32, #tpu.memory_space<smem>>
      %147 = vector.extract_strided_slice %130 {offsets = [3, 0], sizes = [16, 16], strides = [1, 1]} : vector<24x16xf32> to vector<16x16xf32>
      %148 = vector.broadcast %146 : f32 to vector<16x16xf32>
      %149 = arith.mulf %148, %147 : vector<16x16xf32>
      %150 = arith.addf %145, %149 : vector<16x16xf32>
      %c31 = arith.constant 31 : index
      %151 = memref.load %arg2[%c31] : memref<98xf32, #tpu.memory_space<smem>>
      %152 = vector.extract_strided_slice %130 {offsets = [4, 0], sizes = [16, 16], strides = [1, 1]} : vector<24x16xf32> to vector<16x16xf32>
      %153 = vector.broadcast %151 : f32 to vector<16x16xf32>
      %154 = arith.mulf %153, %152 : vector<16x16xf32>
      %155 = arith.addf %150, %154 : vector<16x16xf32>
      %c38 = arith.constant 38 : index
      %156 = memref.load %arg2[%c38] : memref<98xf32, #tpu.memory_space<smem>>
      %157 = vector.extract_strided_slice %130 {offsets = [5, 0], sizes = [16, 16], strides = [1, 1]} : vector<24x16xf32> to vector<16x16xf32>
      %158 = vector.broadcast %156 : f32 to vector<16x16xf32>
      %159 = arith.mulf %158, %157 : vector<16x16xf32>
      %160 = arith.addf %155, %159 : vector<16x16xf32>
      %c45 = arith.constant 45 : index
      %161 = memref.load %arg2[%c45] : memref<98xf32, #tpu.memory_space<smem>>
      %162 = vector.extract_strided_slice %130 {offsets = [6, 0], sizes = [16, 16], strides = [1, 1]} : vector<24x16xf32> to vector<16x16xf32>
      %163 = vector.broadcast %161 : f32 to vector<16x16xf32>
      %164 = arith.mulf %163, %162 : vector<16x16xf32>
      %165 = arith.addf %160, %164 : vector<16x16xf32>
      %166 = vector.extract_strided_slice %21 {offsets = [0, 4], sizes = [24, 16], strides = [1, 1]} : vector<24x128xf32> to vector<24x16xf32>
      %c4 = arith.constant 4 : index
      %167 = memref.load %arg2[%c4] : memref<98xf32, #tpu.memory_space<smem>>
      %168 = vector.extract_strided_slice %166 {offsets = [0, 0], sizes = [16, 16], strides = [1, 1]} : vector<24x16xf32> to vector<16x16xf32>
      %169 = vector.broadcast %167 : f32 to vector<16x16xf32>
      %170 = arith.mulf %169, %168 : vector<16x16xf32>
      %171 = arith.addf %165, %170 : vector<16x16xf32>
      %c11 = arith.constant 11 : index
      %172 = memref.load %arg2[%c11] : memref<98xf32, #tpu.memory_space<smem>>
      %173 = vector.extract_strided_slice %166 {offsets = [1, 0], sizes = [16, 16], strides = [1, 1]} : vector<24x16xf32> to vector<16x16xf32>
      %174 = vector.broadcast %172 : f32 to vector<16x16xf32>
      %175 = arith.mulf %174, %173 : vector<16x16xf32>
      %176 = arith.addf %171, %175 : vector<16x16xf32>
      %c18 = arith.constant 18 : index
      %177 = memref.load %arg2[%c18] : memref<98xf32, #tpu.memory_space<smem>>
      %178 = vector.extract_strided_slice %166 {offsets = [2, 0], sizes = [16, 16], strides = [1, 1]} : vector<24x16xf32> to vector<16x16xf32>
      %179 = vector.broadcast %177 : f32 to vector<16x16xf32>
      %180 = arith.mulf %179, %178 : vector<16x16xf32>
      %181 = arith.addf %176, %180 : vector<16x16xf32>
      %c25 = arith.constant 25 : index
      %182 = memref.load %arg2[%c25] : memref<98xf32, #tpu.memory_space<smem>>
      %183 = vector.extract_strided_slice %166 {offsets = [3, 0], sizes = [16, 16], strides = [1, 1]} : vector<24x16xf32> to vector<16x16xf32>
      %184 = vector.broadcast %182 : f32 to vector<16x16xf32>
      %185 = arith.mulf %184, %183 : vector<16x16xf32>
      %186 = arith.addf %181, %185 : vector<16x16xf32>
      %c32 = arith.constant 32 : index
      %187 = memref.load %arg2[%c32] : memref<98xf32, #tpu.memory_space<smem>>
      %188 = vector.extract_strided_slice %166 {offsets = [4, 0], sizes = [16, 16], strides = [1, 1]} : vector<24x16xf32> to vector<16x16xf32>
      %189 = vector.broadcast %187 : f32 to vector<16x16xf32>
      %190 = arith.mulf %189, %188 : vector<16x16xf32>
      %191 = arith.addf %186, %190 : vector<16x16xf32>
      %c39 = arith.constant 39 : index
      %192 = memref.load %arg2[%c39] : memref<98xf32, #tpu.memory_space<smem>>
      %193 = vector.extract_strided_slice %166 {offsets = [5, 0], sizes = [16, 16], strides = [1, 1]} : vector<24x16xf32> to vector<16x16xf32>
      %194 = vector.broadcast %192 : f32 to vector<16x16xf32>
      %195 = arith.mulf %194, %193 : vector<16x16xf32>
      %196 = arith.addf %191, %195 : vector<16x16xf32>
      %c46 = arith.constant 46 : index
      %197 = memref.load %arg2[%c46] : memref<98xf32, #tpu.memory_space<smem>>
      %198 = vector.extract_strided_slice %166 {offsets = [6, 0], sizes = [16, 16], strides = [1, 1]} : vector<24x16xf32> to vector<16x16xf32>
      %199 = vector.broadcast %197 : f32 to vector<16x16xf32>
      %200 = arith.mulf %199, %198 : vector<16x16xf32>
      %201 = arith.addf %196, %200 : vector<16x16xf32>
      %202 = vector.extract_strided_slice %21 {offsets = [0, 5], sizes = [24, 16], strides = [1, 1]} : vector<24x128xf32> to vector<24x16xf32>
      %c5 = arith.constant 5 : index
      %203 = memref.load %arg2[%c5] : memref<98xf32, #tpu.memory_space<smem>>
      %204 = vector.extract_strided_slice %202 {offsets = [0, 0], sizes = [16, 16], strides = [1, 1]} : vector<24x16xf32> to vector<16x16xf32>
      %205 = vector.broadcast %203 : f32 to vector<16x16xf32>
      %206 = arith.mulf %205, %204 : vector<16x16xf32>
      %207 = arith.addf %201, %206 : vector<16x16xf32>
      %c12 = arith.constant 12 : index
      %208 = memref.load %arg2[%c12] : memref<98xf32, #tpu.memory_space<smem>>
      %209 = vector.extract_strided_slice %202 {offsets = [1, 0], sizes = [16, 16], strides = [1, 1]} : vector<24x16xf32> to vector<16x16xf32>
      %210 = vector.broadcast %208 : f32 to vector<16x16xf32>
      %211 = arith.mulf %210, %209 : vector<16x16xf32>
      %212 = arith.addf %207, %211 : vector<16x16xf32>
      %c19 = arith.constant 19 : index
      %213 = memref.load %arg2[%c19] : memref<98xf32, #tpu.memory_space<smem>>
      %214 = vector.extract_strided_slice %202 {offsets = [2, 0], sizes = [16, 16], strides = [1, 1]} : vector<24x16xf32> to vector<16x16xf32>
      %215 = vector.broadcast %213 : f32 to vector<16x16xf32>
      %216 = arith.mulf %215, %214 : vector<16x16xf32>
      %217 = arith.addf %212, %216 : vector<16x16xf32>
      %c26 = arith.constant 26 : index
      %218 = memref.load %arg2[%c26] : memref<98xf32, #tpu.memory_space<smem>>
      %219 = vector.extract_strided_slice %202 {offsets = [3, 0], sizes = [16, 16], strides = [1, 1]} : vector<24x16xf32> to vector<16x16xf32>
      %220 = vector.broadcast %218 : f32 to vector<16x16xf32>
      %221 = arith.mulf %220, %219 : vector<16x16xf32>
      %222 = arith.addf %217, %221 : vector<16x16xf32>
      %c33 = arith.constant 33 : index
      %223 = memref.load %arg2[%c33] : memref<98xf32, #tpu.memory_space<smem>>
      %224 = vector.extract_strided_slice %202 {offsets = [4, 0], sizes = [16, 16], strides = [1, 1]} : vector<24x16xf32> to vector<16x16xf32>
      %225 = vector.broadcast %223 : f32 to vector<16x16xf32>
      %226 = arith.mulf %225, %224 : vector<16x16xf32>
      %227 = arith.addf %222, %226 : vector<16x16xf32>
      %c40 = arith.constant 40 : index
      %228 = memref.load %arg2[%c40] : memref<98xf32, #tpu.memory_space<smem>>
      %229 = vector.extract_strided_slice %202 {offsets = [5, 0], sizes = [16, 16], strides = [1, 1]} : vector<24x16xf32> to vector<16x16xf32>
      %230 = vector.broadcast %228 : f32 to vector<16x16xf32>
      %231 = arith.mulf %230, %229 : vector<16x16xf32>
      %232 = arith.addf %227, %231 : vector<16x16xf32>
      %c47 = arith.constant 47 : index
      %233 = memref.load %arg2[%c47] : memref<98xf32, #tpu.memory_space<smem>>
      %234 = vector.extract_strided_slice %202 {offsets = [6, 0], sizes = [16, 16], strides = [1, 1]} : vector<24x16xf32> to vector<16x16xf32>
      %235 = vector.broadcast %233 : f32 to vector<16x16xf32>
      %236 = arith.mulf %235, %234 : vector<16x16xf32>
      %237 = arith.addf %232, %236 : vector<16x16xf32>
      %238 = vector.extract_strided_slice %21 {offsets = [0, 6], sizes = [24, 16], strides = [1, 1]} : vector<24x128xf32> to vector<24x16xf32>
      %c6 = arith.constant 6 : index
      %239 = memref.load %arg2[%c6] : memref<98xf32, #tpu.memory_space<smem>>
      %240 = vector.extract_strided_slice %238 {offsets = [0, 0], sizes = [16, 16], strides = [1, 1]} : vector<24x16xf32> to vector<16x16xf32>
      %241 = vector.broadcast %239 : f32 to vector<16x16xf32>
      %242 = arith.mulf %241, %240 : vector<16x16xf32>
      %243 = arith.addf %237, %242 : vector<16x16xf32>
      %c13 = arith.constant 13 : index
      %244 = memref.load %arg2[%c13] : memref<98xf32, #tpu.memory_space<smem>>
      %245 = vector.extract_strided_slice %238 {offsets = [1, 0], sizes = [16, 16], strides = [1, 1]} : vector<24x16xf32> to vector<16x16xf32>
      %246 = vector.broadcast %244 : f32 to vector<16x16xf32>
      %247 = arith.mulf %246, %245 : vector<16x16xf32>
      %248 = arith.addf %243, %247 : vector<16x16xf32>
      %c20 = arith.constant 20 : index
      %249 = memref.load %arg2[%c20] : memref<98xf32, #tpu.memory_space<smem>>
      %250 = vector.extract_strided_slice %238 {offsets = [2, 0], sizes = [16, 16], strides = [1, 1]} : vector<24x16xf32> to vector<16x16xf32>
      %251 = vector.broadcast %249 : f32 to vector<16x16xf32>
      %252 = arith.mulf %251, %250 : vector<16x16xf32>
      %253 = arith.addf %248, %252 : vector<16x16xf32>
      %c27 = arith.constant 27 : index
      %254 = memref.load %arg2[%c27] : memref<98xf32, #tpu.memory_space<smem>>
      %255 = vector.extract_strided_slice %238 {offsets = [3, 0], sizes = [16, 16], strides = [1, 1]} : vector<24x16xf32> to vector<16x16xf32>
      %256 = vector.broadcast %254 : f32 to vector<16x16xf32>
      %257 = arith.mulf %256, %255 : vector<16x16xf32>
      %258 = arith.addf %253, %257 : vector<16x16xf32>
      %c34 = arith.constant 34 : index
      %259 = memref.load %arg2[%c34] : memref<98xf32, #tpu.memory_space<smem>>
      %260 = vector.extract_strided_slice %238 {offsets = [4, 0], sizes = [16, 16], strides = [1, 1]} : vector<24x16xf32> to vector<16x16xf32>
      %261 = vector.broadcast %259 : f32 to vector<16x16xf32>
      %262 = arith.mulf %261, %260 : vector<16x16xf32>
      %263 = arith.addf %258, %262 : vector<16x16xf32>
      %c41 = arith.constant 41 : index
      %264 = memref.load %arg2[%c41] : memref<98xf32, #tpu.memory_space<smem>>
      %265 = vector.extract_strided_slice %238 {offsets = [5, 0], sizes = [16, 16], strides = [1, 1]} : vector<24x16xf32> to vector<16x16xf32>
      %266 = vector.broadcast %264 : f32 to vector<16x16xf32>
      %267 = arith.mulf %266, %265 : vector<16x16xf32>
      %268 = arith.addf %263, %267 : vector<16x16xf32>
      %c48 = arith.constant 48 : index
      %269 = memref.load %arg2[%c48] : memref<98xf32, #tpu.memory_space<smem>>
      %270 = vector.extract_strided_slice %238 {offsets = [6, 0], sizes = [16, 16], strides = [1, 1]} : vector<24x16xf32> to vector<16x16xf32>
      %271 = vector.broadcast %269 : f32 to vector<16x16xf32>
      %272 = arith.mulf %271, %270 : vector<16x16xf32>
      %273 = arith.addf %268, %272 : vector<16x16xf32>
      %c1_23 = arith.constant 1 : index
      %c0_24 = arith.constant 0 : index
      %c0_25 = arith.constant 0 : index
      %274 = vector.load %arg7[%c1_23, %c0_24, %c0_25] : memref<2x24x128xf32, #tpu.memory_space<vmem>>, vector<1x24x128xf32>
      %275 = vector.shape_cast %274 : vector<1x24x128xf32> to vector<24x128xf32>
      %276 = vector.extract_strided_slice %275 {offsets = [0, 0], sizes = [24, 16], strides = [1, 1]} : vector<24x128xf32> to vector<24x16xf32>
      %c49 = arith.constant 49 : index
      %277 = memref.load %arg2[%c49] : memref<98xf32, #tpu.memory_space<smem>>
      %278 = vector.extract_strided_slice %276 {offsets = [0, 0], sizes = [16, 16], strides = [1, 1]} : vector<24x16xf32> to vector<16x16xf32>
      %279 = vector.broadcast %277 : f32 to vector<16x16xf32>
      %280 = arith.mulf %279, %278 : vector<16x16xf32>
      %281 = arith.addf %273, %280 : vector<16x16xf32>
      %c56 = arith.constant 56 : index
      %282 = memref.load %arg2[%c56] : memref<98xf32, #tpu.memory_space<smem>>
      %283 = vector.extract_strided_slice %276 {offsets = [1, 0], sizes = [16, 16], strides = [1, 1]} : vector<24x16xf32> to vector<16x16xf32>
      %284 = vector.broadcast %282 : f32 to vector<16x16xf32>
      %285 = arith.mulf %284, %283 : vector<16x16xf32>
      %286 = arith.addf %281, %285 : vector<16x16xf32>
      %c63 = arith.constant 63 : index
      %287 = memref.load %arg2[%c63] : memref<98xf32, #tpu.memory_space<smem>>
      %288 = vector.extract_strided_slice %276 {offsets = [2, 0], sizes = [16, 16], strides = [1, 1]} : vector<24x16xf32> to vector<16x16xf32>
      %289 = vector.broadcast %287 : f32 to vector<16x16xf32>
      %290 = arith.mulf %289, %288 : vector<16x16xf32>
      %291 = arith.addf %286, %290 : vector<16x16xf32>
      %c70 = arith.constant 70 : index
      %292 = memref.load %arg2[%c70] : memref<98xf32, #tpu.memory_space<smem>>
      %293 = vector.extract_strided_slice %276 {offsets = [3, 0], sizes = [16, 16], strides = [1, 1]} : vector<24x16xf32> to vector<16x16xf32>
      %294 = vector.broadcast %292 : f32 to vector<16x16xf32>
      %295 = arith.mulf %294, %293 : vector<16x16xf32>
      %296 = arith.addf %291, %295 : vector<16x16xf32>
      %c77 = arith.constant 77 : index
      %297 = memref.load %arg2[%c77] : memref<98xf32, #tpu.memory_space<smem>>
      %298 = vector.extract_strided_slice %276 {offsets = [4, 0], sizes = [16, 16], strides = [1, 1]} : vector<24x16xf32> to vector<16x16xf32>
      %299 = vector.broadcast %297 : f32 to vector<16x16xf32>
      %300 = arith.mulf %299, %298 : vector<16x16xf32>
      %301 = arith.addf %296, %300 : vector<16x16xf32>
      %c84 = arith.constant 84 : index
      %302 = memref.load %arg2[%c84] : memref<98xf32, #tpu.memory_space<smem>>
      %303 = vector.extract_strided_slice %276 {offsets = [5, 0], sizes = [16, 16], strides = [1, 1]} : vector<24x16xf32> to vector<16x16xf32>
      %304 = vector.broadcast %302 : f32 to vector<16x16xf32>
      %305 = arith.mulf %304, %303 : vector<16x16xf32>
      %306 = arith.addf %301, %305 : vector<16x16xf32>
      %c91 = arith.constant 91 : index
      %307 = memref.load %arg2[%c91] : memref<98xf32, #tpu.memory_space<smem>>
      %308 = vector.extract_strided_slice %276 {offsets = [6, 0], sizes = [16, 16], strides = [1, 1]} : vector<24x16xf32> to vector<16x16xf32>
      %309 = vector.broadcast %307 : f32 to vector<16x16xf32>
      %310 = arith.mulf %309, %308 : vector<16x16xf32>
      %311 = arith.addf %306, %310 : vector<16x16xf32>
      %312 = vector.extract_strided_slice %275 {offsets = [0, 1], sizes = [24, 16], strides = [1, 1]} : vector<24x128xf32> to vector<24x16xf32>
      %c50 = arith.constant 50 : index
      %313 = memref.load %arg2[%c50] : memref<98xf32, #tpu.memory_space<smem>>
      %314 = vector.extract_strided_slice %312 {offsets = [0, 0], sizes = [16, 16], strides = [1, 1]} : vector<24x16xf32> to vector<16x16xf32>
      %315 = vector.broadcast %313 : f32 to vector<16x16xf32>
      %316 = arith.mulf %315, %314 : vector<16x16xf32>
      %317 = arith.addf %311, %316 : vector<16x16xf32>
      %c57 = arith.constant 57 : index
      %318 = memref.load %arg2[%c57] : memref<98xf32, #tpu.memory_space<smem>>
      %319 = vector.extract_strided_slice %312 {offsets = [1, 0], sizes = [16, 16], strides = [1, 1]} : vector<24x16xf32> to vector<16x16xf32>
      %320 = vector.broadcast %318 : f32 to vector<16x16xf32>
      %321 = arith.mulf %320, %319 : vector<16x16xf32>
      %322 = arith.addf %317, %321 : vector<16x16xf32>
      %c64 = arith.constant 64 : index
      %323 = memref.load %arg2[%c64] : memref<98xf32, #tpu.memory_space<smem>>
      %324 = vector.extract_strided_slice %312 {offsets = [2, 0], sizes = [16, 16], strides = [1, 1]} : vector<24x16xf32> to vector<16x16xf32>
      %325 = vector.broadcast %323 : f32 to vector<16x16xf32>
      %326 = arith.mulf %325, %324 : vector<16x16xf32>
      %327 = arith.addf %322, %326 : vector<16x16xf32>
      %c71 = arith.constant 71 : index
      %328 = memref.load %arg2[%c71] : memref<98xf32, #tpu.memory_space<smem>>
      %329 = vector.extract_strided_slice %312 {offsets = [3, 0], sizes = [16, 16], strides = [1, 1]} : vector<24x16xf32> to vector<16x16xf32>
      %330 = vector.broadcast %328 : f32 to vector<16x16xf32>
      %331 = arith.mulf %330, %329 : vector<16x16xf32>
      %332 = arith.addf %327, %331 : vector<16x16xf32>
      %c78 = arith.constant 78 : index
      %333 = memref.load %arg2[%c78] : memref<98xf32, #tpu.memory_space<smem>>
      %334 = vector.extract_strided_slice %312 {offsets = [4, 0], sizes = [16, 16], strides = [1, 1]} : vector<24x16xf32> to vector<16x16xf32>
      %335 = vector.broadcast %333 : f32 to vector<16x16xf32>
      %336 = arith.mulf %335, %334 : vector<16x16xf32>
      %337 = arith.addf %332, %336 : vector<16x16xf32>
      %c85 = arith.constant 85 : index
      %338 = memref.load %arg2[%c85] : memref<98xf32, #tpu.memory_space<smem>>
      %339 = vector.extract_strided_slice %312 {offsets = [5, 0], sizes = [16, 16], strides = [1, 1]} : vector<24x16xf32> to vector<16x16xf32>
      %340 = vector.broadcast %338 : f32 to vector<16x16xf32>
      %341 = arith.mulf %340, %339 : vector<16x16xf32>
      %342 = arith.addf %337, %341 : vector<16x16xf32>
      %c92 = arith.constant 92 : index
      %343 = memref.load %arg2[%c92] : memref<98xf32, #tpu.memory_space<smem>>
      %344 = vector.extract_strided_slice %312 {offsets = [6, 0], sizes = [16, 16], strides = [1, 1]} : vector<24x16xf32> to vector<16x16xf32>
      %345 = vector.broadcast %343 : f32 to vector<16x16xf32>
      %346 = arith.mulf %345, %344 : vector<16x16xf32>
      %347 = arith.addf %342, %346 : vector<16x16xf32>
      %348 = vector.extract_strided_slice %275 {offsets = [0, 2], sizes = [24, 16], strides = [1, 1]} : vector<24x128xf32> to vector<24x16xf32>
      %c51 = arith.constant 51 : index
      %349 = memref.load %arg2[%c51] : memref<98xf32, #tpu.memory_space<smem>>
      %350 = vector.extract_strided_slice %348 {offsets = [0, 0], sizes = [16, 16], strides = [1, 1]} : vector<24x16xf32> to vector<16x16xf32>
      %351 = vector.broadcast %349 : f32 to vector<16x16xf32>
      %352 = arith.mulf %351, %350 : vector<16x16xf32>
      %353 = arith.addf %347, %352 : vector<16x16xf32>
      %c58 = arith.constant 58 : index
      %354 = memref.load %arg2[%c58] : memref<98xf32, #tpu.memory_space<smem>>
      %355 = vector.extract_strided_slice %348 {offsets = [1, 0], sizes = [16, 16], strides = [1, 1]} : vector<24x16xf32> to vector<16x16xf32>
      %356 = vector.broadcast %354 : f32 to vector<16x16xf32>
      %357 = arith.mulf %356, %355 : vector<16x16xf32>
      %358 = arith.addf %353, %357 : vector<16x16xf32>
      %c65 = arith.constant 65 : index
      %359 = memref.load %arg2[%c65] : memref<98xf32, #tpu.memory_space<smem>>
      %360 = vector.extract_strided_slice %348 {offsets = [2, 0], sizes = [16, 16], strides = [1, 1]} : vector<24x16xf32> to vector<16x16xf32>
      %361 = vector.broadcast %359 : f32 to vector<16x16xf32>
      %362 = arith.mulf %361, %360 : vector<16x16xf32>
      %363 = arith.addf %358, %362 : vector<16x16xf32>
      %c72 = arith.constant 72 : index
      %364 = memref.load %arg2[%c72] : memref<98xf32, #tpu.memory_space<smem>>
      %365 = vector.extract_strided_slice %348 {offsets = [3, 0], sizes = [16, 16], strides = [1, 1]} : vector<24x16xf32> to vector<16x16xf32>
      %366 = vector.broadcast %364 : f32 to vector<16x16xf32>
      %367 = arith.mulf %366, %365 : vector<16x16xf32>
      %368 = arith.addf %363, %367 : vector<16x16xf32>
      %c79 = arith.constant 79 : index
      %369 = memref.load %arg2[%c79] : memref<98xf32, #tpu.memory_space<smem>>
      %370 = vector.extract_strided_slice %348 {offsets = [4, 0], sizes = [16, 16], strides = [1, 1]} : vector<24x16xf32> to vector<16x16xf32>
      %371 = vector.broadcast %369 : f32 to vector<16x16xf32>
      %372 = arith.mulf %371, %370 : vector<16x16xf32>
      %373 = arith.addf %368, %372 : vector<16x16xf32>
      %c86 = arith.constant 86 : index
      %374 = memref.load %arg2[%c86] : memref<98xf32, #tpu.memory_space<smem>>
      %375 = vector.extract_strided_slice %348 {offsets = [5, 0], sizes = [16, 16], strides = [1, 1]} : vector<24x16xf32> to vector<16x16xf32>
      %376 = vector.broadcast %374 : f32 to vector<16x16xf32>
      %377 = arith.mulf %376, %375 : vector<16x16xf32>
      %378 = arith.addf %373, %377 : vector<16x16xf32>
      %c93 = arith.constant 93 : index
      %379 = memref.load %arg2[%c93] : memref<98xf32, #tpu.memory_space<smem>>
      %380 = vector.extract_strided_slice %348 {offsets = [6, 0], sizes = [16, 16], strides = [1, 1]} : vector<24x16xf32> to vector<16x16xf32>
      %381 = vector.broadcast %379 : f32 to vector<16x16xf32>
      %382 = arith.mulf %381, %380 : vector<16x16xf32>
      %383 = arith.addf %378, %382 : vector<16x16xf32>
      %384 = vector.extract_strided_slice %275 {offsets = [0, 3], sizes = [24, 16], strides = [1, 1]} : vector<24x128xf32> to vector<24x16xf32>
      %c52 = arith.constant 52 : index
      %385 = memref.load %arg2[%c52] : memref<98xf32, #tpu.memory_space<smem>>
      %386 = vector.extract_strided_slice %384 {offsets = [0, 0], sizes = [16, 16], strides = [1, 1]} : vector<24x16xf32> to vector<16x16xf32>
      %387 = vector.broadcast %385 : f32 to vector<16x16xf32>
      %388 = arith.mulf %387, %386 : vector<16x16xf32>
      %389 = arith.addf %383, %388 : vector<16x16xf32>
      %c59 = arith.constant 59 : index
      %390 = memref.load %arg2[%c59] : memref<98xf32, #tpu.memory_space<smem>>
      %391 = vector.extract_strided_slice %384 {offsets = [1, 0], sizes = [16, 16], strides = [1, 1]} : vector<24x16xf32> to vector<16x16xf32>
      %392 = vector.broadcast %390 : f32 to vector<16x16xf32>
      %393 = arith.mulf %392, %391 : vector<16x16xf32>
      %394 = arith.addf %389, %393 : vector<16x16xf32>
      %c66 = arith.constant 66 : index
      %395 = memref.load %arg2[%c66] : memref<98xf32, #tpu.memory_space<smem>>
      %396 = vector.extract_strided_slice %384 {offsets = [2, 0], sizes = [16, 16], strides = [1, 1]} : vector<24x16xf32> to vector<16x16xf32>
      %397 = vector.broadcast %395 : f32 to vector<16x16xf32>
      %398 = arith.mulf %397, %396 : vector<16x16xf32>
      %399 = arith.addf %394, %398 : vector<16x16xf32>
      %c73 = arith.constant 73 : index
      %400 = memref.load %arg2[%c73] : memref<98xf32, #tpu.memory_space<smem>>
      %401 = vector.extract_strided_slice %384 {offsets = [3, 0], sizes = [16, 16], strides = [1, 1]} : vector<24x16xf32> to vector<16x16xf32>
      %402 = vector.broadcast %400 : f32 to vector<16x16xf32>
      %403 = arith.mulf %402, %401 : vector<16x16xf32>
      %404 = arith.addf %399, %403 : vector<16x16xf32>
      %c80 = arith.constant 80 : index
      %405 = memref.load %arg2[%c80] : memref<98xf32, #tpu.memory_space<smem>>
      %406 = vector.extract_strided_slice %384 {offsets = [4, 0], sizes = [16, 16], strides = [1, 1]} : vector<24x16xf32> to vector<16x16xf32>
      %407 = vector.broadcast %405 : f32 to vector<16x16xf32>
      %408 = arith.mulf %407, %406 : vector<16x16xf32>
      %409 = arith.addf %404, %408 : vector<16x16xf32>
      %c87 = arith.constant 87 : index
      %410 = memref.load %arg2[%c87] : memref<98xf32, #tpu.memory_space<smem>>
      %411 = vector.extract_strided_slice %384 {offsets = [5, 0], sizes = [16, 16], strides = [1, 1]} : vector<24x16xf32> to vector<16x16xf32>
      %412 = vector.broadcast %410 : f32 to vector<16x16xf32>
      %413 = arith.mulf %412, %411 : vector<16x16xf32>
      %414 = arith.addf %409, %413 : vector<16x16xf32>
      %c94 = arith.constant 94 : index
      %415 = memref.load %arg2[%c94] : memref<98xf32, #tpu.memory_space<smem>>
      %416 = vector.extract_strided_slice %384 {offsets = [6, 0], sizes = [16, 16], strides = [1, 1]} : vector<24x16xf32> to vector<16x16xf32>
      %417 = vector.broadcast %415 : f32 to vector<16x16xf32>
      %418 = arith.mulf %417, %416 : vector<16x16xf32>
      %419 = arith.addf %414, %418 : vector<16x16xf32>
      %420 = vector.extract_strided_slice %275 {offsets = [0, 4], sizes = [24, 16], strides = [1, 1]} : vector<24x128xf32> to vector<24x16xf32>
      %c53 = arith.constant 53 : index
      %421 = memref.load %arg2[%c53] : memref<98xf32, #tpu.memory_space<smem>>
      %422 = vector.extract_strided_slice %420 {offsets = [0, 0], sizes = [16, 16], strides = [1, 1]} : vector<24x16xf32> to vector<16x16xf32>
      %423 = vector.broadcast %421 : f32 to vector<16x16xf32>
      %424 = arith.mulf %423, %422 : vector<16x16xf32>
      %425 = arith.addf %419, %424 : vector<16x16xf32>
      %c60 = arith.constant 60 : index
      %426 = memref.load %arg2[%c60] : memref<98xf32, #tpu.memory_space<smem>>
      %427 = vector.extract_strided_slice %420 {offsets = [1, 0], sizes = [16, 16], strides = [1, 1]} : vector<24x16xf32> to vector<16x16xf32>
      %428 = vector.broadcast %426 : f32 to vector<16x16xf32>
      %429 = arith.mulf %428, %427 : vector<16x16xf32>
      %430 = arith.addf %425, %429 : vector<16x16xf32>
      %c67 = arith.constant 67 : index
      %431 = memref.load %arg2[%c67] : memref<98xf32, #tpu.memory_space<smem>>
      %432 = vector.extract_strided_slice %420 {offsets = [2, 0], sizes = [16, 16], strides = [1, 1]} : vector<24x16xf32> to vector<16x16xf32>
      %433 = vector.broadcast %431 : f32 to vector<16x16xf32>
      %434 = arith.mulf %433, %432 : vector<16x16xf32>
      %435 = arith.addf %430, %434 : vector<16x16xf32>
      %c74 = arith.constant 74 : index
      %436 = memref.load %arg2[%c74] : memref<98xf32, #tpu.memory_space<smem>>
      %437 = vector.extract_strided_slice %420 {offsets = [3, 0], sizes = [16, 16], strides = [1, 1]} : vector<24x16xf32> to vector<16x16xf32>
      %438 = vector.broadcast %436 : f32 to vector<16x16xf32>
      %439 = arith.mulf %438, %437 : vector<16x16xf32>
      %440 = arith.addf %435, %439 : vector<16x16xf32>
      %c81 = arith.constant 81 : index
      %441 = memref.load %arg2[%c81] : memref<98xf32, #tpu.memory_space<smem>>
      %442 = vector.extract_strided_slice %420 {offsets = [4, 0], sizes = [16, 16], strides = [1, 1]} : vector<24x16xf32> to vector<16x16xf32>
      %443 = vector.broadcast %441 : f32 to vector<16x16xf32>
      %444 = arith.mulf %443, %442 : vector<16x16xf32>
      %445 = arith.addf %440, %444 : vector<16x16xf32>
      %c88 = arith.constant 88 : index
      %446 = memref.load %arg2[%c88] : memref<98xf32, #tpu.memory_space<smem>>
      %447 = vector.extract_strided_slice %420 {offsets = [5, 0], sizes = [16, 16], strides = [1, 1]} : vector<24x16xf32> to vector<16x16xf32>
      %448 = vector.broadcast %446 : f32 to vector<16x16xf32>
      %449 = arith.mulf %448, %447 : vector<16x16xf32>
      %450 = arith.addf %445, %449 : vector<16x16xf32>
      %c95 = arith.constant 95 : index
      %451 = memref.load %arg2[%c95] : memref<98xf32, #tpu.memory_space<smem>>
      %452 = vector.extract_strided_slice %420 {offsets = [6, 0], sizes = [16, 16], strides = [1, 1]} : vector<24x16xf32> to vector<16x16xf32>
      %453 = vector.broadcast %451 : f32 to vector<16x16xf32>
      %454 = arith.mulf %453, %452 : vector<16x16xf32>
      %455 = arith.addf %450, %454 : vector<16x16xf32>
      %456 = vector.extract_strided_slice %275 {offsets = [0, 5], sizes = [24, 16], strides = [1, 1]} : vector<24x128xf32> to vector<24x16xf32>
      %c54 = arith.constant 54 : index
      %457 = memref.load %arg2[%c54] : memref<98xf32, #tpu.memory_space<smem>>
      %458 = vector.extract_strided_slice %456 {offsets = [0, 0], sizes = [16, 16], strides = [1, 1]} : vector<24x16xf32> to vector<16x16xf32>
      %459 = vector.broadcast %457 : f32 to vector<16x16xf32>
      %460 = arith.mulf %459, %458 : vector<16x16xf32>
      %461 = arith.addf %455, %460 : vector<16x16xf32>
      %c61 = arith.constant 61 : index
      %462 = memref.load %arg2[%c61] : memref<98xf32, #tpu.memory_space<smem>>
      %463 = vector.extract_strided_slice %456 {offsets = [1, 0], sizes = [16, 16], strides = [1, 1]} : vector<24x16xf32> to vector<16x16xf32>
      %464 = vector.broadcast %462 : f32 to vector<16x16xf32>
      %465 = arith.mulf %464, %463 : vector<16x16xf32>
      %466 = arith.addf %461, %465 : vector<16x16xf32>
      %c68 = arith.constant 68 : index
      %467 = memref.load %arg2[%c68] : memref<98xf32, #tpu.memory_space<smem>>
      %468 = vector.extract_strided_slice %456 {offsets = [2, 0], sizes = [16, 16], strides = [1, 1]} : vector<24x16xf32> to vector<16x16xf32>
      %469 = vector.broadcast %467 : f32 to vector<16x16xf32>
      %470 = arith.mulf %469, %468 : vector<16x16xf32>
      %471 = arith.addf %466, %470 : vector<16x16xf32>
      %c75 = arith.constant 75 : index
      %472 = memref.load %arg2[%c75] : memref<98xf32, #tpu.memory_space<smem>>
      %473 = vector.extract_strided_slice %456 {offsets = [3, 0], sizes = [16, 16], strides = [1, 1]} : vector<24x16xf32> to vector<16x16xf32>
      %474 = vector.broadcast %472 : f32 to vector<16x16xf32>
      %475 = arith.mulf %474, %473 : vector<16x16xf32>
      %476 = arith.addf %471, %475 : vector<16x16xf32>
      %c82 = arith.constant 82 : index
      %477 = memref.load %arg2[%c82] : memref<98xf32, #tpu.memory_space<smem>>
      %478 = vector.extract_strided_slice %456 {offsets = [4, 0], sizes = [16, 16], strides = [1, 1]} : vector<24x16xf32> to vector<16x16xf32>
      %479 = vector.broadcast %477 : f32 to vector<16x16xf32>
      %480 = arith.mulf %479, %478 : vector<16x16xf32>
      %481 = arith.addf %476, %480 : vector<16x16xf32>
      %c89 = arith.constant 89 : index
      %482 = memref.load %arg2[%c89] : memref<98xf32, #tpu.memory_space<smem>>
      %483 = vector.extract_strided_slice %456 {offsets = [5, 0], sizes = [16, 16], strides = [1, 1]} : vector<24x16xf32> to vector<16x16xf32>
      %484 = vector.broadcast %482 : f32 to vector<16x16xf32>
      %485 = arith.mulf %484, %483 : vector<16x16xf32>
      %486 = arith.addf %481, %485 : vector<16x16xf32>
      %c96 = arith.constant 96 : index
      %487 = memref.load %arg2[%c96] : memref<98xf32, #tpu.memory_space<smem>>
      %488 = vector.extract_strided_slice %456 {offsets = [6, 0], sizes = [16, 16], strides = [1, 1]} : vector<24x16xf32> to vector<16x16xf32>
      %489 = vector.broadcast %487 : f32 to vector<16x16xf32>
      %490 = arith.mulf %489, %488 : vector<16x16xf32>
      %491 = arith.addf %486, %490 : vector<16x16xf32>
      %492 = vector.extract_strided_slice %275 {offsets = [0, 6], sizes = [24, 16], strides = [1, 1]} : vector<24x128xf32> to vector<24x16xf32>
      %c55 = arith.constant 55 : index
      %493 = memref.load %arg2[%c55] : memref<98xf32, #tpu.memory_space<smem>>
      %494 = vector.extract_strided_slice %492 {offsets = [0, 0], sizes = [16, 16], strides = [1, 1]} : vector<24x16xf32> to vector<16x16xf32>
      %495 = vector.broadcast %493 : f32 to vector<16x16xf32>
      %496 = arith.mulf %495, %494 : vector<16x16xf32>
      %497 = arith.addf %491, %496 : vector<16x16xf32>
      %c62 = arith.constant 62 : index
      %498 = memref.load %arg2[%c62] : memref<98xf32, #tpu.memory_space<smem>>
      %499 = vector.extract_strided_slice %492 {offsets = [1, 0], sizes = [16, 16], strides = [1, 1]} : vector<24x16xf32> to vector<16x16xf32>
      %500 = vector.broadcast %498 : f32 to vector<16x16xf32>
      %501 = arith.mulf %500, %499 : vector<16x16xf32>
      %502 = arith.addf %497, %501 : vector<16x16xf32>
      %c69 = arith.constant 69 : index
      %503 = memref.load %arg2[%c69] : memref<98xf32, #tpu.memory_space<smem>>
      %504 = vector.extract_strided_slice %492 {offsets = [2, 0], sizes = [16, 16], strides = [1, 1]} : vector<24x16xf32> to vector<16x16xf32>
      %505 = vector.broadcast %503 : f32 to vector<16x16xf32>
      %506 = arith.mulf %505, %504 : vector<16x16xf32>
      %507 = arith.addf %502, %506 : vector<16x16xf32>
      %c76 = arith.constant 76 : index
      %508 = memref.load %arg2[%c76] : memref<98xf32, #tpu.memory_space<smem>>
      %509 = vector.extract_strided_slice %492 {offsets = [3, 0], sizes = [16, 16], strides = [1, 1]} : vector<24x16xf32> to vector<16x16xf32>
      %510 = vector.broadcast %508 : f32 to vector<16x16xf32>
      %511 = arith.mulf %510, %509 : vector<16x16xf32>
      %512 = arith.addf %507, %511 : vector<16x16xf32>
      %c83 = arith.constant 83 : index
      %513 = memref.load %arg2[%c83] : memref<98xf32, #tpu.memory_space<smem>>
      %514 = vector.extract_strided_slice %492 {offsets = [4, 0], sizes = [16, 16], strides = [1, 1]} : vector<24x16xf32> to vector<16x16xf32>
      %515 = vector.broadcast %513 : f32 to vector<16x16xf32>
      %516 = arith.mulf %515, %514 : vector<16x16xf32>
      %517 = arith.addf %512, %516 : vector<16x16xf32>
      %c90 = arith.constant 90 : index
      %518 = memref.load %arg2[%c90] : memref<98xf32, #tpu.memory_space<smem>>
      %519 = vector.extract_strided_slice %492 {offsets = [5, 0], sizes = [16, 16], strides = [1, 1]} : vector<24x16xf32> to vector<16x16xf32>
      %520 = vector.broadcast %518 : f32 to vector<16x16xf32>
      %521 = arith.mulf %520, %519 : vector<16x16xf32>
      %522 = arith.addf %517, %521 : vector<16x16xf32>
      %c97 = arith.constant 97 : index
      %523 = memref.load %arg2[%c97] : memref<98xf32, #tpu.memory_space<smem>>
      %524 = vector.extract_strided_slice %492 {offsets = [6, 0], sizes = [16, 16], strides = [1, 1]} : vector<24x16xf32> to vector<16x16xf32>
      %525 = vector.broadcast %523 : f32 to vector<16x16xf32>
      %526 = arith.mulf %525, %524 : vector<16x16xf32>
      %527 = arith.addf %522, %526 : vector<16x16xf32>
      %528 = arith.negf %527 : vector<16x16xf32>
      %529 = math.exp %528 : vector<16x16xf32>
      %cst_26 = arith.constant 1.000000e+00 : f32
      %530 = vector.broadcast %cst_26 : f32 to vector<16x16xf32>
      %531 = arith.addf %530, %529 : vector<16x16xf32>
      %532 = arith.divf %530, %531 : vector<16x16xf32>
      %c0_27 = arith.constant 0 : index
      %c0_28 = arith.constant 0 : index
      %c0_29 = arith.constant 0 : index
      %533 = vector.load %arg4[%c0_27, %c0_28, %c0_29] : memref<1x16x16xf32, #tpu.memory_space<vmem>>, vector<1x16x16xf32>
      %534 = vector.shape_cast %533 : vector<1x16x16xf32> to vector<16x16xf32>
      %535 = vector.shape_cast %532 : vector<16x16xf32> to vector<1x16x16xf32>
      tpu.vector_store %arg4[%c0_27, %c0_28, %c0_29], %535 {strides = array<i32>} : memref<1x16x16xf32, #tpu.memory_space<vmem>>, vector<1x16x16xf32>,
    } else {
    }
    return
  }
  func.func @transform_0(%arg0: i32, %arg1: i32) -> i32 {
    %c0_i32 = arith.constant 0 : i32
    %c0_i32_0 = arith.constant 0 : i32
    return %c0_i32 : i32
  }
  func.func @transform_1(%arg0: i32, %arg1: i32) -> (i32, i32, i32, i32) {
    %c0_i32 = arith.constant 0 : i32
    %c0_i32_0 = arith.constant 0 : i32
    %c0_i32_1 = arith.constant 0 : i32
    return %arg0, %arg1, %c0_i32, %c0_i32_0 : i32, i32, i32, i32
  }
  func.func @transform_2(%arg0: i32, %arg1: i32) -> (i32, i32, i32) {
    %c0_i32 = arith.constant 0 : i32
    %c0_i32_0 = arith.constant 0 : i32
    %c0_i32_1 = arith.constant 0 : i32
    return %arg0, %c0_i32, %c0_i32_0 : i32, i32, i32
  }
}

</mosaic_0001>

<llo_original>
// kernel: tpu_custom_call.1
$region0: #{tpu_custom_call.1}
  #allocation0 [shape = 'u32[]', space=smem, size = 0x4, offset = 0x4, fixed_abs, tag = 'smem constant byte address 0x4 - core index']
  #allocation1 [shape = 'u32[144,128]{1,0:T(1,128)}', space=vmem, size = 0x12000, scoped, tag = 'internal scratch']
  #allocation2 [shape = 'f32[16,16]{1,0:T(8,128)}', space=vmem, size = 0x2000, scoped, tag = 'scratch operand']
  #allocation3 [shape = 'f32[16,16]{1,0:T(8,128)}', space=vmem, size = 0x2000, scoped, tag = 'scratch operand']
  #allocation4 [shape = 'f32[2,24,128]{2,1,0:T(8,128)}', space=vmem, size = 0x6000, scoped, tag = 'scratch operand']
  %s0 = inlined_call_operand.hbm [shape: f32[98], index: 0, kind: input, shape index: {}]
  %s1 = inlined_call_operand.hbm [shape: f32[2,4,16,16], index: 1, kind: input, shape index: {}]
  %s2 = inlined_call_operand.hbm [shape: f32[2,16,16], index: 2, kind: output, shape index: {}]
  %s3 = sld [smem:[#allocation0]]
  $region64: #{tpu_custom_call.1} parent=0
    _
  %s5 = ssub.s32 1, %s3
  %s6 = scalar_select 0, %s5, %s3
  $region1: #{tpu_custom_call.1} parent=0
    #allocation5 [shape = 'u8[512]{0}', space=smem, size = 0x200, scoped, tag = 'input window, operand 0, single buffered']
    #allocation6 [shape = 's32[2]{0}', space=sflag, size = 0x8, scoped, tag = 'scoped memory for tpu_custom_call.1']
    #allocation7 [shape = 's32[2]{0}', space=sflag, size = 0x8, scoped, tag = 'scoped memory for tpu_custom_call.1']
    #allocation8 [shape = 's32[2]{0}', space=sflag, size = 0x8, scoped, tag = 'scoped memory for tpu_custom_call.1']
    #allocation9 [shape = 'u8[65536]{0}', space=vmem, size = 0x10000, scoped, tag = 'input window, operand 1']
    #allocation10 [shape = 'u8[16384]{0}', space=vmem, size = 0x4000, scoped, tag = 'output window, operand 0']
    %7 = vsyncpa [#allocation8], 0
    %8 = vsyncpa [#allocation6], 0
    %s9 = scalar_lea.sflag [#allocation6], 1
    %10 = vsyncpa %s9, 0
    %11 = vsyncpa [#allocation7], 0
    %s12 = scalar_lea.sflag [#allocation7], 1
    %13 = vsyncpa %s12, 0
    loop: start=0, step=1, limit=4
    $region2: #{tpu_custom_call.1} parent=1 // loop_pre_header
      _
    $region3: #{tpu_custom_call.1} parent=1 // loop_header
      %s15 = sphi 0, %s19
      %p16 = scmp.ge.s32.totalorder %s15, 4
      %s22 = sphi 0, %s34
      %s23 = sphi 0, %s30
      %s24 = sphi 0, %s22
      %s25 = sphi 0, %s23
      %s26 = sphi 0, %s24
      %s27 = sphi 0, %s25
      %s35 = sphi 0, %s35
      %s37 = sphi 0, %s35
      %s38 = sphi 0, %s37
      %s52 = sphi 0, %s38
      %s60 = sphi 0, %s62
      %s63 = sphi 0, %s60
      %s64 = sphi 0, %s63
      %s80 = sphi 0, %s64
      %s86 = sphi 0, %s88
      %s89 = sphi 0, %s86
      %s90 = sphi 0, %s89
      %s106 = sphi 0, %s90
    $region4: #{tpu_custom_call.1} parent=1 // loop_header_branch
      %18 = sbr.rel (%p16) target = $region8
    $region5: #{tpu_custom_call.1} parent=1 // loop_body
      %s20 = ssub.s32 %s15, 1
      %s21 = ssub.s32 %s15, 2
      %s28 = sadd.s32 1, %s23
      %p29 = scmp.ge.s32.totalorder %s28, 1
      %s30 = scalar_select %p29, 0, %s28
      %s31 = sadd.s32 1, %s22
      %s32 = scalar_select %p29, %s31, %s22
      %p33 = scmp.ge.s32.totalorder %s32, 2
      %s34 = scalar_select %p33, 0, %s32
      %s36 = sadd.s32 %s35, 1
      %p39 = scmp.eq.s32.totalorder %s15, 1
      %p40 = scmp.ne.s32.totalorder %s35, %s37
      %p41 = scmp.eq.s32.totalorder %s15, 0
      %p42 = por %p40, %p41
      %p43 = scmp.ne.s32.totalorder %s35, %s37
      %p44 = scmp.eq.s32.totalorder %s20, 1
      %p45 = por %p43, %p44
      %p46 = scmp.ne.s32.totalorder %s37, %s38
      %p47 = scmp.eq.s32.totalorder %s20, 0
      %p48 = por %p46, %p47
      %p49 = scmp.ne.s32.totalorder %s37, %s38
      %p50 = scmp.eq.s32.totalorder %s21, 1
      %p51 = por %p49, %p50
      %p53 = scmp.ne.s32.totalorder %s38, %s52
      %p54 = scmp.eq.s32.totalorder %s21, 0
      %p55 = por %p53, %p54
      %s56 = ssub.s32 %s22, %s34
      %s57 = ssub.s32 %s23, %s30
      %s58 = sor.u32 %s56, %s57
      %p59 = scmp.eq.s32.totalorder %s58, 0
      %s61 = sadd.s32 %s60, 1
      %s62 = scalar_select %p59, %s60, %s61
      %p65 = pneg %p59
      %p66 = scmp.eq.s32.totalorder %s15, 1
      %p67 = por %p65, %p66
      %p68 = scmp.ne.s32.totalorder %s60, %s63
      %p69 = scmp.eq.s32.totalorder %s15, 0
      %p70 = por %p68, %p69
      %p71 = scmp.ne.s32.totalorder %s60, %s63
      %p72 = scmp.eq.s32.totalorder %s20, 1
      %p73 = por %p71, %p72
      %p74 = scmp.ne.s32.totalorder %s63, %s64
      %p75 = scmp.eq.s32.totalorder %s20, 0
      %p76 = por %p74, %p75
      %p77 = scmp.ne.s32.totalorder %s63, %s64
      %p78 = scmp.eq.s32.totalorder %s21, 1
      %p79 = por %p77, %p78
      %p81 = scmp.ne.s32.totalorder %s64, %s80
      %p82 = scmp.eq.s32.totalorder %s21, 0
      %p83 = por %p81, %p82
      %s84 = ssub.s32 %s22, %s34
      %p85 = scmp.eq.s32.totalorder %s84, 0
      %s87 = sadd.s32 %s86, 1
      %s88 = scalar_select %p85, %s86, %s87
      %p91 = pneg %p85
      %p92 = scmp.eq.s32.totalorder %s15, 1
      %p93 = por %p91, %p92
      %p94 = scmp.ne.s32.totalorder %s86, %s89
      %p95 = scmp.eq.s32.totalorder %s15, 0
      %p96 = por %p94, %p95
      %p97 = scmp.ne.s32.totalorder %s86, %s89
      %p98 = scmp.eq.s32.totalorder %s20, 1
      %p99 = por %p97, %p98
      %p100 = scmp.ne.s32.totalorder %s89, %s90
      %p101 = scmp.eq.s32.totalorder %s20, 0
      %p102 = por %p100, %p101
      %p103 = scmp.ne.s32.totalorder %s89, %s90
      %p104 = scmp.eq.s32.totalorder %s21, 1
      %p105 = por %p103, %p104
      %p107 = scmp.ne.s32.totalorder %s90, %s106
      %p108 = scmp.eq.s32.totalorder %s21, 0
      %p109 = por %p107, %p108
      %p110 = scmp.le.s32.totalorder 1, %s15
      %p111 = scmp.lt.s32.totalorder %s15, 3
      %p112 = pnand %p110, %p111
      %p113 = pneg %p112
      // Predicated region
      $region9: #{tpu_custom_call.1} parent=5 // pred_check
        _
      $region10: #{tpu_custom_call.1} parent=5 // pred_check_branch
        %115 = sbr.rel (%p112) target = $region12
      $region11: #{tpu_custom_call.1} parent=5 // pred_region
        %s116 = ssub.s32 %s15, 1
        // Predicated region
        $region13: #{tpu_custom_call.1} parent=11 // pred_check
          %p117 = pneg %p48
        $region14: #{tpu_custom_call.1} parent=11 // pred_check_branch
          %119 = sbr.rel (%p117) target = $region16
        $region15: #{tpu_custom_call.1} parent=11 // pred_region
          %s121 = ssub.s32 16, 16
          %122 = vsyncadd [#allocation8], %s121
          %125 = dma.hbm_to_smem %s0, 16, [#allocation5], [#allocation8]
        $region16: #{tpu_custom_call.1} parent=11 // pred_fallthru
          _
      $region12: #{tpu_custom_call.1} parent=5 // pred_fallthru
        _
      %p126 = scmp.lt.s32.totalorder %s15, 2
      // Predicated region
      $region17: #{tpu_custom_call.1} parent=5 // pred_check
        %p127 = pneg %p126
      $region18: #{tpu_custom_call.1} parent=5 // pred_check_branch
        %129 = sbr.rel (%p127) target = $region20
      $region19: #{tpu_custom_call.1} parent=5 // pred_region
        // Predicated region
        $region21: #{tpu_custom_call.1} parent=19 // pred_check
          %p130 = pneg %p70
        $region22: #{tpu_custom_call.1} parent=19 // pred_check_branch
          %132 = sbr.rel (%p130) target = $region24
        $region23: #{tpu_custom_call.1} parent=19 // pred_region
          %s133 = sand.u32 %s60, 1
          %s134 = scalar_lea.sflag [#allocation6], %s133
          %s135 = sand.u32 %s60, 1
          %s136 = smul.addr %s135, 64
          %s137 = scalar_lea.vmem [#allocation9], %s136
          %s138 = smul.u32 4, %s23
          %s140 = ssub.s32 1024, 1024
          %141 = vsyncadd %s134, %s140
          %s142 = smul.addr %s138, 2
          %s143 = smul.addr %s22, 8
          %s144 = sadd.s32 %s142, %s143
          %s145 = smul.addr %s144, 128
          %s146 = scalar_lea.hbm %s1, %s145
          %s147 = sshll.u32 %s137, 4
          %s148 = int_to_ptr.vmem [resolvable:$true] %s147
          %153 = dma.hbm_to_vmem [thread:$0]  %s146, 1024, %s148, %s134, 128, 128, 8
        $region24: #{tpu_custom_call.1} parent=19 // pred_fallthru
          _
      $region20: #{tpu_custom_call.1} parent=5 // pred_fallthru
        _
      %p154 = scmp.le.s32.totalorder 1, %s15
      %p155 = scmp.lt.s32.totalorder %s15, 3
      %p156 = pnand %p154, %p155
      %p157 = pneg %p156
      // Predicated region
      $region25: #{tpu_custom_call.1} parent=5 // pred_check
        _
      $region26: #{tpu_custom_call.1} parent=5 // pred_check_branch
        %159 = sbr.rel (%p156) target = $region28
      $region27: #{tpu_custom_call.1} parent=5 // pred_region
        %s160 = ssub.s32 %s15, 1
        // Predicated region
        $region29: #{tpu_custom_call.1} parent=27 // pred_check
          %p161 = pneg %p48
        $region30: #{tpu_custom_call.1} parent=27 // pred_check_branch
          %163 = sbr.rel (%p161) target = $region32
        $region31: #{tpu_custom_call.1} parent=27 // pred_region
          %164 = dma.done [#allocation8], 16
        $region32: #{tpu_custom_call.1} parent=27 // pred_fallthru
          _
        %s165 = sand.u32 %s63, 1
        %s166 = scalar_lea.sflag [#allocation6], %s165
        %s167 = sand.u32 %s63, 1
        %s168 = smul.addr %s167, 64
        %s169 = scalar_lea.vmem [#allocation9], %s168
        // Predicated region
        $region33: #{tpu_custom_call.1} parent=27 // pred_check
          %p170 = pneg %p76
        $region34: #{tpu_custom_call.1} parent=27 // pred_check_branch
          %172 = sbr.rel (%p170) target = $region36
        $region35: #{tpu_custom_call.1} parent=27 // pred_region
          %173 = dma.done %s166, 1024
        $region36: #{tpu_custom_call.1} parent=27 // pred_fallthru
          _
        %174 = sfence
        %p175 = pneg %p48
        %p176 = pneg %p45
        %s177 = sand.u32 %s63, 1
        %s178 = scalar_lea.sflag [#allocation6], %s177
        %s179 = sand.u32 %s63, 1
        %s180 = smul.addr %s179, 64
        %s181 = scalar_lea.vmem [#allocation9], %s180
        %p182 = pneg %p76
        %p183 = pneg %p73
        %p184 = pneg %p102
        %p185 = pneg %p99
        %s186 = sand.u32 %s89, 1
        %s187 = scalar_lea.sflag [#allocation7], %s186
        %s188 = sand.u32 %s89, 1
        %s189 = smul.addr %s188, 16
        %s190 = scalar_lea.vmem [#allocation10], %s189
        %s191 = smul.u32 4, %s25
        %p192 = scmp.eq.s32.totalorder %s25, 0
        // Predicated region
        $region37: #{tpu_custom_call.1} parent=27 // pred_check
          %p193 = pneg %p192
        $region38: #{tpu_custom_call.1} parent=27 // pred_check_branch
          %195 = sbr.rel (%p193) target = $region40
        $region39: #{tpu_custom_call.1} parent=27 // pred_region
          %vm196 = vcmask 130048
          %197 = vst.msk [vmem:[#allocation2] sm:$0xff] %vm196, 0.0
          %198 = vst.msk [vmem:[#allocation2 + $0x8] sm:$0xff] %vm196, 0.0
          %199 = vst.msk [vmem:[#allocation3] sm:$0xff] %vm196, -inf
          %200 = vst.msk [vmem:[#allocation3 + $0x8] sm:$0xff] %vm196, -inf
        $region40: #{tpu_custom_call.1} parent=27 // pred_fallthru
          _
        loop: start=0, step=1, limit=4
        $region41: #{tpu_custom_call.1} parent=27 // loop_pre_header
          _
        $region42: #{tpu_custom_call.1} parent=27 // loop_header
          %s202 = sphi 0, %s206
          %p203 = scmp.ge.s32.totalorder %s202, 4
        $region43: #{tpu_custom_call.1} parent=27 // loop_header_branch
          %205 = sbr.rel (%p203) target = $region47
        $region44: #{tpu_custom_call.1} parent=27 // loop_body
          %s207 = smul.u32 %s202, 16
          %s208 = scalar_lea.vmem %s169, %s207 [#allocation9]
          %v209 = vld [vmem:[%s208] sm:$0xff]
          %v210 = vld [vmem:[%s208 + $0x8] sm:$0xff]
          %v211 = vld [vmem:[#allocation2] sm:$0xff]
          %v212 = vld [vmem:[#allocation2 + $0x8] sm:$0xff]
          %v213 = vadd.f32 %v211, %v209
          %v214 = vadd.f32 %v212, %v210
          %vm215 = vcmask 130048
          %216 = vst.msk [vmem:[#allocation2] sm:$0xff] %vm215, %v213
          %217 = vst.msk [vmem:[#allocation2 + $0x8] sm:$0xff] %vm215, %v214
          %v218 = vld [vmem:[#allocation3] sm:$0xff]
          %v219 = vld [vmem:[#allocation3 + $0x8] sm:$0xff]
          %v220 = vmax.f32 %v218, %v209
          %v221 = vmax.f32 %v219, %v210
          %222 = vst.msk [vmem:[#allocation3] sm:$0xff] %vm215, %v220
          %223 = vst.msk [vmem:[#allocation3 + $0x8] sm:$0xff] %vm215, %v221
        $region45: #{tpu_custom_call.1} parent=27 // loop_footer
          %s206 = sadd.s32 1, %s202
        $region46: #{tpu_custom_call.1} parent=27 // loop_footer_branch
          %201 = sbr.rel target = $region42
        $region47: #{tpu_custom_call.1} parent=27 // loop_exit
          _
        // Predicated region
        $region48: #{tpu_custom_call.1} parent=27 // pred_check
          %p224 = pneg %p192
        $region49: #{tpu_custom_call.1} parent=27 // pred_check_branch
          %226 = sbr.rel (%p224) target = $region51
        $region50: #{tpu_custom_call.1} parent=27 // pred_region
          %227 = vst [vmem:[#allocation4] sm:$0xff] 0.0
          %228 = vst [vmem:[#allocation4 + $0x8] sm:$0xff] 0.0
          %229 = vst [vmem:[#allocation4 + $0x10] sm:$0xff] 0.0
          %230 = vst [vmem:[#allocation4 + $0x18] sm:$0xff] 0.0
          %231 = vst [vmem:[#allocation4 + $0x20] sm:$0xff] 0.0
          %232 = vst [vmem:[#allocation4 + $0x28] sm:$0xff] 0.0
          %v233 = vld [vmem:[#allocation2] sm:$0xff]
          %v234 = vld [vmem:[#allocation2 + $0x8] sm:$0xff]
          %v235 = vmul.f32 %v233, 0.25
          %v236 = vmul.f32 %v234, 0.25
          %239 = vrot.lane.b32.xlu0 %v235, 3
          %v240 = vpop.permute.xlu0 %239
          %241 = vrot.lane.b32.xlu0 %v236, 3
          %v242 = vpop.permute.xlu0 %241
          %vm245 = vcmask 154648
          %246 = vst.msk [vmem:[#allocation4 + $0x3] sm:$0xff] %vm245, %v240
          %247 = vst.msk [vmem:[#allocation4 + $0xb] sm:$0xff] %vm245, %v242
          %v248 = vld [vmem:[#allocation3] sm:$0xff]
          %v249 = vld [vmem:[#allocation3 + $0x8] sm:$0xff]
          %252 = vrot.lane.b32.xlu0 %v248, 3
          %v253 = vpop.permute.xlu0 %252
          %254 = vrot.lane.b32.xlu0 %v249, 3
          %v255 = vpop.permute.xlu0 %254
          %s258 = scalar_lea.vmem [#allocation4], 24
          %259 = vst.msk [vmem:[%s258 + $0x3] sm:$0xff] %vm245, %v253
          %260 = vst.msk [vmem:[%s258 + $0xb] sm:$0xff] %vm245, %v255
          %v261 = vld [vmem:[#allocation4] sm:$0xff]
          %v262 = vld [vmem:[#allocation4 + $0x8] sm:$0xff]
          %v263 = vld [vmem:[#allocation4 + $0x10] sm:$0xff]
          %s264 = sld [smem:[#allocation5]]
          %v265 = vstv %s264
          %v266 = vmul.f32 %v265, %v261
          %v267 = vmul.f32 %v265, %v262
          %v268 = vadd.f32 %v266, 0.0
          %v269 = vadd.f32 %v267, 0.0
          %s270 = sld [smem:[#allocation5 + $0x7]]
          %v271 = vstv %s270
          %v272 = vmul.f32 %v271, %v261
          %v273 = vmul.f32 %v271, %v262
          %v274 = vmul.f32 %v271, %v263
          %vm278 = vcmask 1046528
          %v279 = vrot.slane %v272, 1
          %v280 = vrot.slane %v273, 1
          %v281 = vsel %vm278, %v279, %v280
          %v282 = vrot.slane %v274, 1
          %v283 = vsel %vm278, %v280, %v282
          %v286 = vadd.f32 %v268, %v281
          %v287 = vadd.f32 %v269, %v283
          %s288 = sld [smem:[#allocation5 + $0xe]]
          %v289 = vstv %s288
          %v290 = vmul.f32 %v289, %v261
          %v291 = vmul.f32 %v289, %v262
          %v292 = vmul.f32 %v289, %v263
          %vm296 = vcmask 1045504
          %v297 = vrot.slane %v290, 2
          %v298 = vrot.slane %v291, 2
          %v299 = vsel %vm296, %v297, %v298
          %v300 = vrot.slane %v292, 2
          %v301 = vsel %vm296, %v298, %v300
          %v304 = vadd.f32 %v286, %v299
          %v305 = vadd.f32 %v287, %v301
          %s306 = sld [smem:[#allocation5 + $0x15]]
          %v307 = vstv %s306
          %v308 = vmul.f32 %v307, %v261
          %v309 = vmul.f32 %v307, %v262
          %v310 = vmul.f32 %v307, %v263
          %vm314 = vcmask 1044480
          %v315 = vrot.slane %v308, 3
          %v316 = vrot.slane %v309, 3
          %v317 = vsel %vm314, %v315, %v316
          %v318 = vrot.slane %v310, 3
          %v319 = vsel %vm314, %v316, %v318
          %v322 = vadd.f32 %v304, %v317
          %v323 = vadd.f32 %v305, %v319
          %s324 = sld [smem:[#allocation5 + $0x1c]]
          %v325 = vstv %s324
          %v326 = vmul.f32 %v325, %v261
          %v327 = vmul.f32 %v325, %v262
          %v328 = vmul.f32 %v325, %v263
          %vm332 = vcmask 1043456
          %v333 = vrot.slane %v326, 4
          %v334 = vrot.slane %v327, 4
          %v335 = vsel %vm332, %v333, %v334
          %v336 = vrot.slane %v328, 4
          %v337 = vsel %vm332, %v334, %v336
          %v340 = vadd.f32 %v322, %v335
          %v341 = vadd.f32 %v323, %v337
          %s342 = sld [smem:[#allocation5 + $0x23]]
          %v343 = vstv %s342
          %v344 = vmul.f32 %v343, %v261
          %v345 = vmul.f32 %v343, %v262
          %v346 = vmul.f32 %v343, %v263
          %vm350 = vcmask 1042432
          %v351 = vrot.slane %v344, 5
          %v352 = vrot.slane %v345, 5
          %v353 = vsel %vm350, %v351, %v352
          %v354 = vrot.slane %v346, 5
          %v355 = vsel %vm350, %v352, %v354
          %v358 = vadd.f32 %v340, %v353
          %v359 = vadd.f32 %v341, %v355
          %s360 = sld [smem:[#allocation5 + $0x2a]]
          %v361 = vstv %s360
          %v362 = vmul.f32 %v361, %v261
          %v363 = vmul.f32 %v361, %v262
          %v364 = vmul.f32 %v361, %v263
          %vm368 = vcmask 1041408
          %v369 = vrot.slane %v362, 6
          %v370 = vrot.slane %v363, 6
          %v371 = vsel %vm368, %v369, %v370
          %v372 = vrot.slane %v364, 6
          %v373 = vsel %vm368, %v370, %v372
          %v376 = vadd.f32 %v358, %v371
          %v377 = vadd.f32 %v359, %v373
          %s378 = sld [smem:[#allocation5 + $0x1]]
          %v379 = vstv %s378
          %v380 = vmul.f32 %v379, %v261
          %v381 = vmul.f32 %v379, %v262
          %384 = vrot.lane.b32.xlu0 %v380, 127
          %v385 = vpop.permute.xlu0 %384
          %386 = vrot.lane.b32.xlu0 %v381, 127
          %v387 = vpop.permute.xlu0 %386
          %v390 = vadd.f32 %v376, %v385
          %v391 = vadd.f32 %v377, %v387
          %s392 = sld [smem:[#allocation5 + $0x8]]
          %v393 = vstv %s392
          %v394 = vmul.f32 %v393, %v261
          %v395 = vmul.f32 %v393, %v262
          %v396 = vmul.f32 %v393, %v263
          %v400 = vrot.slane %v394, 1
          %v401 = vrot.slane %v395, 1
          %v402 = vsel %vm278, %v400, %v401
          %v403 = vrot.slane %v396, 1
          %v404 = vsel %vm278, %v401, %v403
          %405 = vrot.lane.b32.xlu0 %v402, 127
          %v406 = vpop.permute.xlu0 %405
          %407 = vrot.lane.b32.xlu0 %v404, 127
          %v408 = vpop.permute.xlu0 %407
          %v411 = vadd.f32 %v390, %v406
          %v412 = vadd.f32 %v391, %v408
          %s413 = sld [smem:[#allocation5 + $0xf]]
          %v414 = vstv %s413
          %v415 = vmul.f32 %v414, %v261
          %v416 = vmul.f32 %v414, %v262
          %v417 = vmul.f32 %v414, %v263
          %v421 = vrot.slane %v415, 2
          %v422 = vrot.slane %v416, 2
          %v423 = vsel %vm296, %v421, %v422
          %v424 = vrot.slane %v417, 2
          %v425 = vsel %vm296, %v422, %v424
          %426 = vrot.lane.b32.xlu0 %v423, 127
          %v427 = vpop.permute.xlu0 %426
          %428 = vrot.lane.b32.xlu0 %v425, 127
          %v429 = vpop.permute.xlu0 %428
          %v432 = vadd.f32 %v411, %v427
          %v433 = vadd.f32 %v412, %v429
          %s434 = sld [smem:[#allocation5 + $0x16]]
          %v435 = vstv %s434
          %v436 = vmul.f32 %v435, %v261
          %v437 = vmul.f32 %v435, %v262
          %v438 = vmul.f32 %v435, %v263
          %v442 = vrot.slane %v436, 3
          %v443 = vrot.slane %v437, 3
          %v444 = vsel %vm314, %v442, %v443
          %v445 = vrot.slane %v438, 3
          %v446 = vsel %vm314, %v443, %v445
          %447 = vrot.lane.b32.xlu0 %v444, 127
          %v448 = vpop.permute.xlu0 %447
          %449 = vrot.lane.b32.xlu0 %v446, 127
          %v450 = vpop.permute.xlu0 %449
          %v453 = vadd.f32 %v432, %v448
          %v454 = vadd.f32 %v433, %v450
          %s455 = sld [smem:[#allocation5 + $0x1d]]
          %v456 = vstv %s455
          %v457 = vmul.f32 %v456, %v261
          %v458 = vmul.f32 %v456, %v262
          %v459 = vmul.f32 %v456, %v263
          %v463 = vrot.slane %v457, 4
          %v464 = vrot.slane %v458, 4
          %v465 = vsel %vm332, %v463, %v464
          %v466 = vrot.slane %v459, 4
          %v467 = vsel %vm332, %v464, %v466
          %468 = vrot.lane.b32.xlu0 %v465, 127
          %v469 = vpop.permute.xlu0 %468
          %470 = vrot.lane.b32.xlu0 %v467, 127
          %v471 = vpop.permute.xlu0 %470
          %v474 = vadd.f32 %v453, %v469
          %v475 = vadd.f32 %v454, %v471
          %s476 = sld [smem:[#allocation5 + $0x24]]
          %v477 = vstv %s476
          %v478 = vmul.f32 %v477, %v261
          %v479 = vmul.f32 %v477, %v262
          %v480 = vmul.f32 %v477, %v263
          %v484 = vrot.slane %v478, 5
          %v485 = vrot.slane %v479, 5
          %v486 = vsel %vm350, %v484, %v485
          %v487 = vrot.slane %v480, 5
          %v488 = vsel %vm350, %v485, %v487
          %489 = vrot.lane.b32.xlu0 %v486, 127
          %v490 = vpop.permute.xlu0 %489
          %491 = vrot.lane.b32.xlu0 %v488, 127
          %v492 = vpop.permute.xlu0 %491
          %v495 = vadd.f32 %v474, %v490
          %v496 = vadd.f32 %v475, %v492
          %s497 = sld [smem:[#allocation5 + $0x2b]]
          %v498 = vstv %s497
          %v499 = vmul.f32 %v498, %v261
          %v500 = vmul.f32 %v498, %v262
          %v501 = vmul.f32 %v498, %v263
          %v505 = vrot.slane %v499, 6
          %v506 = vrot.slane %v500, 6
          %v507 = vsel %vm368, %v505, %v506
          %v508 = vrot.slane %v501, 6
          %v509 = vsel %vm368, %v506, %v508
          %510 = vrot.lane.b32.xlu0 %v507, 127
          %v511 = vpop.permute.xlu0 %510
          %512 = vrot.lane.b32.xlu0 %v509, 127
          %v513 = vpop.permute.xlu0 %512
          %v516 = vadd.f32 %v495, %v511
          %v517 = vadd.f32 %v496, %v513
          %s518 = sld [smem:[#allocation5 + $0x2]]
          %v519 = vstv %s518
          %v520 = vmul.f32 %v519, %v261
          %v521 = vmul.f32 %v519, %v262
          %524 = vrot.lane.b32.xlu0 %v520, 126
          %v525 = vpop.permute.xlu0 %524
          %526 = vrot.lane.b32.xlu0 %v521, 126
          %v527 = vpop.permute.xlu0 %526
          %v530 = vadd.f32 %v516, %v525
          %v531 = vadd.f32 %v517, %v527
          %s532 = sld [smem:[#allocation5 + $0x9]]
          %v533 = vstv %s532
          %v534 = vmul.f32 %v533, %v261
          %v535 = vmul.f32 %v533, %v262
          %v536 = vmul.f32 %v533, %v263
          %v540 = vrot.slane %v534, 1
          %v541 = vrot.slane %v535, 1
          %v542 = vsel %vm278, %v540, %v541
          %v543 = vrot.slane %v536, 1
          %v544 = vsel %vm278, %v541, %v543
          %545 = vrot.lane.b32.xlu0 %v542, 126
          %v546 = vpop.permute.xlu0 %545
          %547 = vrot.lane.b32.xlu0 %v544, 126
          %v548 = vpop.permute.xlu0 %547
          %v551 = vadd.f32 %v530, %v546
          %v552 = vadd.f32 %v531, %v548
          %s553 = sld [smem:[#allocation5 + $0x10]]
          %v554 = vstv %s553
          %v555 = vmul.f32 %v554, %v261
          %v556 = vmul.f32 %v554, %v262
          %v557 = vmul.f32 %v554, %v263
          %v561 = vrot.slane %v555, 2
          %v562 = vrot.slane %v556, 2
          %v563 = vsel %vm296, %v561, %v562
          %v564 = vrot.slane %v557, 2
          %v565 = vsel %vm296, %v562, %v564
          %566 = vrot.lane.b32.xlu0 %v563, 126
          %v567 = vpop.permute.xlu0 %566
          %568 = vrot.lane.b32.xlu0 %v565, 126
          %v569 = vpop.permute.xlu0 %568
          %v572 = vadd.f32 %v551, %v567
          %v573 = vadd.f32 %v552, %v569
          %s574 = sld [smem:[#allocation5 + $0x17]]
          %v575 = vstv %s574
          %v576 = vmul.f32 %v575, %v261
          %v577 = vmul.f32 %v575, %v262
          %v578 = vmul.f32 %v575, %v263
          %v582 = vrot.slane %v576, 3
          %v583 = vrot.slane %v577, 3
          %v584 = vsel %vm314, %v582, %v583
          %v585 = vrot.slane %v578, 3
          %v586 = vsel %vm314, %v583, %v585
          %587 = vrot.lane.b32.xlu0 %v584, 126
          %v588 = vpop.permute.xlu0 %587
          %589 = vrot.lane.b32.xlu0 %v586, 126
          %v590 = vpop.permute.xlu0 %589
          %v593 = vadd.f32 %v572, %v588
          %v594 = vadd.f32 %v573, %v590
          %s595 = sld [smem:[#allocation5 + $0x1e]]
          %v596 = vstv %s595
          %v597 = vmul.f32 %v596, %v261
          %v598 = vmul.f32 %v596, %v262
          %v599 = vmul.f32 %v596, %v263
          %v603 = vrot.slane %v597, 4
          %v604 = vrot.slane %v598, 4
          %v605 = vsel %vm332, %v603, %v604
          %v606 = vrot.slane %v599, 4
          %v607 = vsel %vm332, %v604, %v606
          %608 = vrot.lane.b32.xlu0 %v605, 126
          %v609 = vpop.permute.xlu0 %608
          %610 = vrot.lane.b32.xlu0 %v607, 126
          %v611 = vpop.permute.xlu0 %610
          %v614 = vadd.f32 %v593, %v609
          %v615 = vadd.f32 %v594, %v611
          %s616 = sld [smem:[#allocation5 + $0x25]]
          %v617 = vstv %s616
          %v618 = vmul.f32 %v617, %v261
          %v619 = vmul.f32 %v617, %v262
          %v620 = vmul.f32 %v617, %v263
          %v624 = vrot.slane %v618, 5
          %v625 = vrot.slane %v619, 5
          %v626 = vsel %vm350, %v624, %v625
          %v627 = vrot.slane %v620, 5
          %v628 = vsel %vm350, %v625, %v627
          %629 = vrot.lane.b32.xlu0 %v626, 126
          %v630 = vpop.permute.xlu0 %629
          %631 = vrot.lane.b32.xlu0 %v628, 126
          %v632 = vpop.permute.xlu0 %631
          %v635 = vadd.f32 %v614, %v630
          %v636 = vadd.f32 %v615, %v632
          %s637 = sld [smem:[#allocation5 + $0x2c]]
          %v638 = vstv %s637
          %v639 = vmul.f32 %v638, %v261
          %v640 = vmul.f32 %v638, %v262
          %v641 = vmul.f32 %v638, %v263
          %v645 = vrot.slane %v639, 6
          %v646 = vrot.slane %v640, 6
          %v647 = vsel %vm368, %v645, %v646
          %v648 = vrot.slane %v641, 6
          %v649 = vsel %vm368, %v646, %v648
          %650 = vrot.lane.b32.xlu0 %v647, 126
          %v651 = vpop.permute.xlu0 %650
          %652 = vrot.lane.b32.xlu0 %v649, 126
          %v653 = vpop.permute.xlu0 %652
          %v656 = vadd.f32 %v635, %v651
          %v657 = vadd.f32 %v636, %v653
          %s658 = sld [smem:[#allocation5 + $0x3]]
          %v659 = vstv %s658
          %v660 = vmul.f32 %v659, %v261
          %v661 = vmul.f32 %v659, %v262
          %664 = vrot.lane.b32.xlu0 %v660, 125
          %v665 = vpop.permute.xlu0 %664
          %666 = vrot.lane.b32.xlu0 %v661, 125
          %v667 = vpop.permute.xlu0 %666
          %v670 = vadd.f32 %v656, %v665
          %v671 = vadd.f32 %v657, %v667
          %s672 = sld [smem:[#allocation5 + $0xa]]
          %v673 = vstv %s672
          %v674 = vmul.f32 %v673, %v261
          %v675 = vmul.f32 %v673, %v262
          %v676 = vmul.f32 %v673, %v263
          %v680 = vrot.slane %v674, 1
          %v681 = vrot.slane %v675, 1
          %v682 = vsel %vm278, %v680, %v681
          %v683 = vrot.slane %v676, 1
          %v684 = vsel %vm278, %v681, %v683
          %685 = vrot.lane.b32.xlu0 %v682, 125
          %v686 = vpop.permute.xlu0 %685
          %687 = vrot.lane.b32.xlu0 %v684, 125
          %v688 = vpop.permute.xlu0 %687
          %v691 = vadd.f32 %v670, %v686
          %v692 = vadd.f32 %v671, %v688
          %s693 = sld [smem:[#allocation5 + $0x11]]
          %v694 = vstv %s693
          %v695 = vmul.f32 %v694, %v261
          %v696 = vmul.f32 %v694, %v262
          %v697 = vmul.f32 %v694, %v263
          %v701 = vrot.slane %v695, 2
          %v702 = vrot.slane %v696, 2
          %v703 = vsel %vm296, %v701, %v702
          %v704 = vrot.slane %v697, 2
          %v705 = vsel %vm296, %v702, %v704
          %706 = vrot.lane.b32.xlu0 %v703, 125
          %v707 = vpop.permute.xlu0 %706
          %708 = vrot.lane.b32.xlu0 %v705, 125
          %v709 = vpop.permute.xlu0 %708
          %v712 = vadd.f32 %v691, %v707
          %v713 = vadd.f32 %v692, %v709
          %s714 = sld [smem:[#allocation5 + $0x18]]
          %v715 = vstv %s714
          %v716 = vmul.f32 %v715, %v261
          %v717 = vmul.f32 %v715, %v262
          %v718 = vmul.f32 %v715, %v263
          %v722 = vrot.slane %v716, 3
          %v723 = vrot.slane %v717, 3
          %v724 = vsel %vm314, %v722, %v723
          %v725 = vrot.slane %v718, 3
          %v726 = vsel %vm314, %v723, %v725
          %727 = vrot.lane.b32.xlu0 %v724, 125
          %v728 = vpop.permute.xlu0 %727
          %729 = vrot.lane.b32.xlu0 %v726, 125
          %v730 = vpop.permute.xlu0 %729
          %v733 = vadd.f32 %v712, %v728
          %v734 = vadd.f32 %v713, %v730
          %s735 = sld [smem:[#allocation5 + $0x1f]]
          %v736 = vstv %s735
          %v737 = vmul.f32 %v736, %v261
          %v738 = vmul.f32 %v736, %v262
          %v739 = vmul.f32 %v736, %v263
          %v743 = vrot.slane %v737, 4
          %v744 = vrot.slane %v738, 4
          %v745 = vsel %vm332, %v743, %v744
          %v746 = vrot.slane %v739, 4
          %v747 = vsel %vm332, %v744, %v746
          %748 = vrot.lane.b32.xlu0 %v745, 125
          %v749 = vpop.permute.xlu0 %748
          %750 = vrot.lane.b32.xlu0 %v747, 125
          %v751 = vpop.permute.xlu0 %750
          %v754 = vadd.f32 %v733, %v749
          %v755 = vadd.f32 %v734, %v751
          %s756 = sld [smem:[#allocation5 + $0x26]]
          %v757 = vstv %s756
          %v758 = vmul.f32 %v757, %v261
          %v759 = vmul.f32 %v757, %v262
          %v760 = vmul.f32 %v757, %v263
          %v764 = vrot.slane %v758, 5
          %v765 = vrot.slane %v759, 5
          %v766 = vsel %vm350, %v764, %v765
          %v767 = vrot.slane %v760, 5
          %v768 = vsel %vm350, %v765, %v767
          %769 = vrot.lane.b32.xlu0 %v766, 125
          %v770 = vpop.permute.xlu0 %769
          %771 = vrot.lane.b32.xlu0 %v768, 125
          %v772 = vpop.permute.xlu0 %771
          %v775 = vadd.f32 %v754, %v770
          %v776 = vadd.f32 %v755, %v772
          %s777 = sld [smem:[#allocation5 + $0x2d]]
          %v778 = vstv %s777
          %v779 = vmul.f32 %v778, %v261
          %v780 = vmul.f32 %v778, %v262
          %v781 = vmul.f32 %v778, %v263
          %v785 = vrot.slane %v779, 6
          %v786 = vrot.slane %v780, 6
          %v787 = vsel %vm368, %v785, %v786
          %v788 = vrot.slane %v781, 6
          %v789 = vsel %vm368, %v786, %v788
          %790 = vrot.lane.b32.xlu0 %v787, 125
          %v791 = vpop.permute.xlu0 %790
          %792 = vrot.lane.b32.xlu0 %v789, 125
          %v793 = vpop.permute.xlu0 %792
          %v796 = vadd.f32 %v775, %v791
          %v797 = vadd.f32 %v776, %v793
          %s798 = sld [smem:[#allocation5 + $0x4]]
          %v799 = vstv %s798
          %v800 = vmul.f32 %v799, %v261
          %v801 = vmul.f32 %v799, %v262
          %804 = vrot.lane.b32.xlu0 %v800, 124
          %v805 = vpop.permute.xlu0 %804
          %806 = vrot.lane.b32.xlu0 %v801, 124
          %v807 = vpop.permute.xlu0 %806
          %v810 = vadd.f32 %v796, %v805
          %v811 = vadd.f32 %v797, %v807
          %s812 = sld [smem:[#allocation5 + $0xb]]
          %v813 = vstv %s812
          %v814 = vmul.f32 %v813, %v261
          %v815 = vmul.f32 %v813, %v262
          %v816 = vmul.f32 %v813, %v263
          %v820 = vrot.slane %v814, 1
          %v821 = vrot.slane %v815, 1
          %v822 = vsel %vm278, %v820, %v821
          %v823 = vrot.slane %v816, 1
          %v824 = vsel %vm278, %v821, %v823
          %825 = vrot.lane.b32.xlu0 %v822, 124
          %v826 = vpop.permute.xlu0 %825
          %827 = vrot.lane.b32.xlu0 %v824, 124
          %v828 = vpop.permute.xlu0 %827
          %v831 = vadd.f32 %v810, %v826
          %v832 = vadd.f32 %v811, %v828
          %s833 = sld [smem:[#allocation5 + $0x12]]
          %v834 = vstv %s833
          %v835 = vmul.f32 %v834, %v261
          %v836 = vmul.f32 %v834, %v262
          %v837 = vmul.f32 %v834, %v263
          %v841 = vrot.slane %v835, 2
          %v842 = vrot.slane %v836, 2
          %v843 = vsel %vm296, %v841, %v842
          %v844 = vrot.slane %v837, 2
          %v845 = vsel %vm296, %v842, %v844
          %846 = vrot.lane.b32.xlu0 %v843, 124
          %v847 = vpop.permute.xlu0 %846
          %848 = vrot.lane.b32.xlu0 %v845, 124
          %v849 = vpop.permute.xlu0 %848
          %v852 = vadd.f32 %v831, %v847
          %v853 = vadd.f32 %v832, %v849
          %s854 = sld [smem:[#allocation5 + $0x19]]
          %v855 = vstv %s854
          %v856 = vmul.f32 %v855, %v261
          %v857 = vmul.f32 %v855, %v262
          %v858 = vmul.f32 %v855, %v263
          %v862 = vrot.slane %v856, 3
          %v863 = vrot.slane %v857, 3
          %v864 = vsel %vm314, %v862, %v863
          %v865 = vrot.slane %v858, 3
          %v866 = vsel %vm314, %v863, %v865
          %867 = vrot.lane.b32.xlu0 %v864, 124
          %v868 = vpop.permute.xlu0 %867
          %869 = vrot.lane.b32.xlu0 %v866, 124
          %v870 = vpop.permute.xlu0 %869
          %v873 = vadd.f32 %v852, %v868
          %v874 = vadd.f32 %v853, %v870
          %s875 = sld [smem:[#allocation5 + $0x20]]
          %v876 = vstv %s875
          %v877 = vmul.f32 %v876, %v261
          %v878 = vmul.f32 %v876, %v262
          %v879 = vmul.f32 %v876, %v263
          %v883 = vrot.slane %v877, 4
          %v884 = vrot.slane %v878, 4
          %v885 = vsel %vm332, %v883, %v884
          %v886 = vrot.slane %v879, 4
          %v887 = vsel %vm332, %v884, %v886
          %888 = vrot.lane.b32.xlu0 %v885, 124
          %v889 = vpop.permute.xlu0 %888
          %890 = vrot.lane.b32.xlu0 %v887, 124
          %v891 = vpop.permute.xlu0 %890
          %v894 = vadd.f32 %v873, %v889
          %v895 = vadd.f32 %v874, %v891
          %s896 = sld [smem:[#allocation5 + $0x27]]
          %v897 = vstv %s896
          %v898 = vmul.f32 %v897, %v261
          %v899 = vmul.f32 %v897, %v262
          %v900 = vmul.f32 %v897, %v263
          %v904 = vrot.slane %v898, 5
          %v905 = vrot.slane %v899, 5
          %v906 = vsel %vm350, %v904, %v905
          %v907 = vrot.slane %v900, 5
          %v908 = vsel %vm350, %v905, %v907
          %909 = vrot.lane.b32.xlu0 %v906, 124
          %v910 = vpop.permute.xlu0 %909
          %911 = vrot.lane.b32.xlu0 %v908, 124
          %v912 = vpop.permute.xlu0 %911
          %v915 = vadd.f32 %v894, %v910
          %v916 = vadd.f32 %v895, %v912
          %s917 = sld [smem:[#allocation5 + $0x2e]]
          %v918 = vstv %s917
          %v919 = vmul.f32 %v918, %v261
          %v920 = vmul.f32 %v918, %v262
          %v921 = vmul.f32 %v918, %v263
          %v925 = vrot.slane %v919, 6
          %v926 = vrot.slane %v920, 6
          %v927 = vsel %vm368, %v925, %v926
          %v928 = vrot.slane %v921, 6
          %v929 = vsel %vm368, %v926, %v928
          %930 = vrot.lane.b32.xlu0 %v927, 124
          %v931 = vpop.permute.xlu0 %930
          %932 = vrot.lane.b32.xlu0 %v929, 124
          %v933 = vpop.permute.xlu0 %932
          %v936 = vadd.f32 %v915, %v931
          %v937 = vadd.f32 %v916, %v933
          %s938 = sld [smem:[#allocation5 + $0x5]]
          %v939 = vstv %s938
          %v940 = vmul.f32 %v939, %v261
          %v941 = vmul.f32 %v939, %v262
          %944 = vrot.lane.b32.xlu0 %v940, 123
          %v945 = vpop.permute.xlu0 %944
          %946 = vrot.lane.b32.xlu0 %v941, 123
          %v947 = vpop.permute.xlu0 %946
          %v950 = vadd.f32 %v936, %v945
          %v951 = vadd.f32 %v937, %v947
          %s952 = sld [smem:[#allocation5 + $0xc]]
          %v953 = vstv %s952
          %v954 = vmul.f32 %v953, %v261
          %v955 = vmul.f32 %v953, %v262
          %v956 = vmul.f32 %v953, %v263
          %v960 = vrot.slane %v954, 1
          %v961 = vrot.slane %v955, 1
          %v962 = vsel %vm278, %v960, %v961
          %v963 = vrot.slane %v956, 1
          %v964 = vsel %vm278, %v961, %v963
          %965 = vrot.lane.b32.xlu0 %v962, 123
          %v966 = vpop.permute.xlu0 %965
          %967 = vrot.lane.b32.xlu0 %v964, 123
          %v968 = vpop.permute.xlu0 %967
          %v971 = vadd.f32 %v950, %v966
          %v972 = vadd.f32 %v951, %v968
          %s973 = sld [smem:[#allocation5 + $0x13]]
          %v974 = vstv %s973
          %v975 = vmul.f32 %v974, %v261
          %v976 = vmul.f32 %v974, %v262
          %v977 = vmul.f32 %v974, %v263
          %v981 = vrot.slane %v975, 2
          %v982 = vrot.slane %v976, 2
          %v983 = vsel %vm296, %v981, %v982
          %v984 = vrot.slane %v977, 2
          %v985 = vsel %vm296, %v982, %v984
          %986 = vrot.lane.b32.xlu0 %v983, 123
          %v987 = vpop.permute.xlu0 %986
          %988 = vrot.lane.b32.xlu0 %v985, 123
          %v989 = vpop.permute.xlu0 %988
          %v992 = vadd.f32 %v971, %v987
          %v993 = vadd.f32 %v972, %v989
          %s994 = sld [smem:[#allocation5 + $0x1a]]
          %v995 = vstv %s994
          %v996 = vmul.f32 %v995, %v261
          %v997 = vmul.f32 %v995, %v262
          %v998 = vmul.f32 %v995, %v263
          %v1002 = vrot.slane %v996, 3
          %v1003 = vrot.slane %v997, 3
          %v1004 = vsel %vm314, %v1002, %v1003
          %v1005 = vrot.slane %v998, 3
          %v1006 = vsel %vm314, %v1003, %v1005
          %1007 = vrot.lane.b32.xlu0 %v1004, 123
          %v1008 = vpop.permute.xlu0 %1007
          %1009 = vrot.lane.b32.xlu0 %v1006, 123
          %v1010 = vpop.permute.xlu0 %1009
          %v1013 = vadd.f32 %v992, %v1008
          %v1014 = vadd.f32 %v993, %v1010
          %s1015 = sld [smem:[#allocation5 + $0x21]]
          %v1016 = vstv %s1015
          %v1017 = vmul.f32 %v1016, %v261
          %v1018 = vmul.f32 %v1016, %v262
          %v1019 = vmul.f32 %v1016, %v263
          %v1023 = vrot.slane %v1017, 4
          %v1024 = vrot.slane %v1018, 4
          %v1025 = vsel %vm332, %v1023, %v1024
          %v1026 = vrot.slane %v1019, 4
          %v1027 = vsel %vm332, %v1024, %v1026
          %1028 = vrot.lane.b32.xlu0 %v1025, 123
          %v1029 = vpop.permute.xlu0 %1028
          %1030 = vrot.lane.b32.xlu0 %v1027, 123
          %v1031 = vpop.permute.xlu0 %1030
          %v1034 = vadd.f32 %v1013, %v1029
          %v1035 = vadd.f32 %v1014, %v1031
          %s1036 = sld [smem:[#allocation5 + $0x28]]
          %v1037 = vstv %s1036
          %v1038 = vmul.f32 %v1037, %v261
          %v1039 = vmul.f32 %v1037, %v262
          %v1040 = vmul.f32 %v1037, %v263
          %v1044 = vrot.slane %v1038, 5
          %v1045 = vrot.slane %v1039, 5
          %v1046 = vsel %vm350, %v1044, %v1045
          %v1047 = vrot.slane %v1040, 5
          %v1048 = vsel %vm350, %v1045, %v1047
          %1049 = vrot.lane.b32.xlu0 %v1046, 123
          %v1050 = vpop.permute.xlu0 %1049
          %1051 = vrot.lane.b32.xlu0 %v1048, 123
          %v1052 = vpop.permute.xlu0 %1051
          %v1055 = vadd.f32 %v1034, %v1050
          %v1056 = vadd.f32 %v1035, %v1052
          %s1057 = sld [smem:[#allocation5 + $0x2f]]
          %v1058 = vstv %s1057
          %v1059 = vmul.f32 %v1058, %v261
          %v1060 = vmul.f32 %v1058, %v262
          %v1061 = vmul.f32 %v1058, %v263
          %v1065 = vrot.slane %v1059, 6
          %v1066 = vrot.slane %v1060, 6
          %v1067 = vsel %vm368, %v1065, %v1066
          %v1068 = vrot.slane %v1061, 6
          %v1069 = vsel %vm368, %v1066, %v1068
          %1070 = vrot.lane.b32.xlu0 %v1067, 123
          %v1071 = vpop.permute.xlu0 %1070
          %1072 = vrot.lane.b32.xlu0 %v1069, 123
          %v1073 = vpop.permute.xlu0 %1072
          %v1076 = vadd.f32 %v1055, %v1071
          %v1077 = vadd.f32 %v1056, %v1073
          %s1078 = sld [smem:[#allocation5 + $0x6]]
          %v1079 = vstv %s1078
          %v1080 = vmul.f32 %v1079, %v261
          %v1081 = vmul.f32 %v1079, %v262
          %1084 = vrot.lane.b32.xlu0 %v1080, 122
          %v1085 = vpop.permute.xlu0 %1084
          %1086 = vrot.lane.b32.xlu0 %v1081, 122
          %v1087 = vpop.permute.xlu0 %1086
          %v1090 = vadd.f32 %v1076, %v1085
          %v1091 = vadd.f32 %v1077, %v1087
          %s1092 = sld [smem:[#allocation5 + $0xd]]
          %v1093 = vstv %s1092
          %v1094 = vmul.f32 %v1093, %v261
          %v1095 = vmul.f32 %v1093, %v262
          %v1096 = vmul.f32 %v1093, %v263
          %v1100 = vrot.slane %v1094, 1
          %v1101 = vrot.slane %v1095, 1
          %v1102 = vsel %vm278, %v1100, %v1101
          %v1103 = vrot.slane %v1096, 1
          %v1104 = vsel %vm278, %v1101, %v1103
          %1105 = vrot.lane.b32.xlu0 %v1102, 122
          %v1106 = vpop.permute.xlu0 %1105
          %1107 = vrot.lane.b32.xlu0 %v1104, 122
          %v1108 = vpop.permute.xlu0 %1107
          %v1111 = vadd.f32 %v1090, %v1106
          %v1112 = vadd.f32 %v1091, %v1108
          %s1113 = sld [smem:[#allocation5 + $0x14]]
          %v1114 = vstv %s1113
          %v1115 = vmul.f32 %v1114, %v261
          %v1116 = vmul.f32 %v1114, %v262
          %v1117 = vmul.f32 %v1114, %v263
          %v1121 = vrot.slane %v1115, 2
          %v1122 = vrot.slane %v1116, 2
          %v1123 = vsel %vm296, %v1121, %v1122
          %v1124 = vrot.slane %v1117, 2
          %v1125 = vsel %vm296, %v1122, %v1124
          %1126 = vrot.lane.b32.xlu0 %v1123, 122
          %v1127 = vpop.permute.xlu0 %1126
          %1128 = vrot.lane.b32.xlu0 %v1125, 122
          %v1129 = vpop.permute.xlu0 %1128
          %v1132 = vadd.f32 %v1111, %v1127
          %v1133 = vadd.f32 %v1112, %v1129
          %s1134 = sld [smem:[#allocation5 + $0x1b]]
          %v1135 = vstv %s1134
          %v1136 = vmul.f32 %v1135, %v261
          %v1137 = vmul.f32 %v1135, %v262
          %v1138 = vmul.f32 %v1135, %v263
          %v1142 = vrot.slane %v1136, 3
          %v1143 = vrot.slane %v1137, 3
          %v1144 = vsel %vm314, %v1142, %v1143
          %v1145 = vrot.slane %v1138, 3
          %v1146 = vsel %vm314, %v1143, %v1145
          %1147 = vrot.lane.b32.xlu0 %v1144, 122
          %v1148 = vpop.permute.xlu0 %1147
          %1149 = vrot.lane.b32.xlu0 %v1146, 122
          %v1150 = vpop.permute.xlu0 %1149
          %v1153 = vadd.f32 %v1132, %v1148
          %v1154 = vadd.f32 %v1133, %v1150
          %s1155 = sld [smem:[#allocation5 + $0x22]]
          %v1156 = vstv %s1155
          %v1157 = vmul.f32 %v1156, %v261
          %v1158 = vmul.f32 %v1156, %v262
          %v1159 = vmul.f32 %v1156, %v263
          %v1163 = vrot.slane %v1157, 4
          %v1164 = vrot.slane %v1158, 4
          %v1165 = vsel %vm332, %v1163, %v1164
          %v1166 = vrot.slane %v1159, 4
          %v1167 = vsel %vm332, %v1164, %v1166
          %1168 = vrot.lane.b32.xlu0 %v1165, 122
          %v1169 = vpop.permute.xlu0 %1168
          %1170 = vrot.lane.b32.xlu0 %v1167, 122
          %v1171 = vpop.permute.xlu0 %1170
          %v1174 = vadd.f32 %v1153, %v1169
          %v1175 = vadd.f32 %v1154, %v1171
          %s1176 = sld [smem:[#allocation5 + $0x29]]
          %v1177 = vstv %s1176
          %v1178 = vmul.f32 %v1177, %v261
          %v1179 = vmul.f32 %v1177, %v262
          %v1180 = vmul.f32 %v1177, %v263
          %v1184 = vrot.slane %v1178, 5
          %v1185 = vrot.slane %v1179, 5
          %v1186 = vsel %vm350, %v1184, %v1185
          %v1187 = vrot.slane %v1180, 5
          %v1188 = vsel %vm350, %v1185, %v1187
          %1189 = vrot.lane.b32.xlu0 %v1186, 122
          %v1190 = vpop.permute.xlu0 %1189
          %1191 = vrot.lane.b32.xlu0 %v1188, 122
          %v1192 = vpop.permute.xlu0 %1191
          %v1195 = vadd.f32 %v1174, %v1190
          %v1196 = vadd.f32 %v1175, %v1192
          %s1197 = sld [smem:[#allocation5 + $0x30]]
          %v1198 = vstv %s1197
          %v1199 = vmul.f32 %v1198, %v261
          %v1200 = vmul.f32 %v1198, %v262
          %v1201 = vmul.f32 %v1198, %v263
          %v1205 = vrot.slane %v1199, 6
          %v1206 = vrot.slane %v1200, 6
          %v1207 = vsel %vm368, %v1205, %v1206
          %v1208 = vrot.slane %v1201, 6
          %v1209 = vsel %vm368, %v1206, %v1208
          %1210 = vrot.lane.b32.xlu0 %v1207, 122
          %v1211 = vpop.permute.xlu0 %1210
          %1212 = vrot.lane.b32.xlu0 %v1209, 122
          %v1213 = vpop.permute.xlu0 %1212
          %v1216 = vadd.f32 %v1195, %v1211
          %v1217 = vadd.f32 %v1196, %v1213
          %v1218 = vld [vmem:[%s258] sm:$0xff]
          %v1219 = vld [vmem:[%s258 + $0x8] sm:$0xff]
          %v1220 = vld [vmem:[%s258 + $0x10] sm:$0xff]
          %s1221 = sld [smem:[#allocation5 + $0x31]]
          %v1222 = vstv %s1221
          %v1223 = vmul.f32 %v1222, %v1218
          %v1224 = vmul.f32 %v1222, %v1219
          %v1225 = vadd.f32 %v1216, %v1223
          %v1226 = vadd.f32 %v1217, %v1224
          %s1227 = sld [smem:[#allocation5 + $0x38]]
          %v1228 = vstv %s1227
          %v1229 = vmul.f32 %v1228, %v1218
          %v1230 = vmul.f32 %v1228, %v1219
          %v1231 = vmul.f32 %v1228, %v1220
          %v1235 = vrot.slane %v1229, 1
          %v1236 = vrot.slane %v1230, 1
          %v1237 = vsel %vm278, %v1235, %v1236
          %v1238 = vrot.slane %v1231, 1
          %v1239 = vsel %vm278, %v1236, %v1238
          %v1242 = vadd.f32 %v1225, %v1237
          %v1243 = vadd.f32 %v1226, %v1239
          %s1244 = sld [smem:[#allocation5 + $0x3f]]
          %v1245 = vstv %s1244
          %v1246 = vmul.f32 %v1245, %v1218
          %v1247 = vmul.f32 %v1245, %v1219
          %v1248 = vmul.f32 %v1245, %v1220
          %v1252 = vrot.slane %v1246, 2
          %v1253 = vrot.slane %v1247, 2
          %v1254 = vsel %vm296, %v1252, %v1253
          %v1255 = vrot.slane %v1248, 2
          %v1256 = vsel %vm296, %v1253, %v1255
          %v1259 = vadd.f32 %v1242, %v1254
          %v1260 = vadd.f32 %v1243, %v1256
          %s1261 = sld [smem:[#allocation5 + $0x46]]
          %v1262 = vstv %s1261
          %v1263 = vmul.f32 %v1262, %v1218
          %v1264 = vmul.f32 %v1262, %v1219
          %v1265 = vmul.f32 %v1262, %v1220
          %v1269 = vrot.slane %v1263, 3
          %v1270 = vrot.slane %v1264, 3
          %v1271 = vsel %vm314, %v1269, %v1270
          %v1272 = vrot.slane %v1265, 3
          %v1273 = vsel %vm314, %v1270, %v1272
          %v1276 = vadd.f32 %v1259, %v1271
          %v1277 = vadd.f32 %v1260, %v1273
          %s1278 = sld [smem:[#allocation5 + $0x4d]]
          %v1279 = vstv %s1278
          %v1280 = vmul.f32 %v1279, %v1218
          %v1281 = vmul.f32 %v1279, %v1219
          %v1282 = vmul.f32 %v1279, %v1220
          %v1286 = vrot.slane %v1280, 4
          %v1287 = vrot.slane %v1281, 4
          %v1288 = vsel %vm332, %v1286, %v1287
          %v1289 = vrot.slane %v1282, 4
          %v1290 = vsel %vm332, %v1287, %v1289
          %v1293 = vadd.f32 %v1276, %v1288
          %v1294 = vadd.f32 %v1277, %v1290
          %s1295 = sld [smem:[#allocation5 + $0x54]]
          %v1296 = vstv %s1295
          %v1297 = vmul.f32 %v1296, %v1218
          %v1298 = vmul.f32 %v1296, %v1219
          %v1299 = vmul.f32 %v1296, %v1220
          %v1303 = vrot.slane %v1297, 5
          %v1304 = vrot.slane %v1298, 5
          %v1305 = vsel %vm350, %v1303, %v1304
          %v1306 = vrot.slane %v1299, 5
          %v1307 = vsel %vm350, %v1304, %v1306
          %v1310 = vadd.f32 %v1293, %v1305
          %v1311 = vadd.f32 %v1294, %v1307
          %s1312 = sld [smem:[#allocation5 + $0x5b]]
          %v1313 = vstv %s1312
          %v1314 = vmul.f32 %v1313, %v1218
          %v1315 = vmul.f32 %v1313, %v1219
          %v1316 = vmul.f32 %v1313, %v1220
          %v1320 = vrot.slane %v1314, 6
          %v1321 = vrot.slane %v1315, 6
          %v1322 = vsel %vm368, %v1320, %v1321
          %v1323 = vrot.slane %v1316, 6
          %v1324 = vsel %vm368, %v1321, %v1323
          %v1327 = vadd.f32 %v1310, %v1322
          %v1328 = vadd.f32 %v1311, %v1324
          %s1329 = sld [smem:[#allocation5 + $0x32]]
          %v1330 = vstv %s1329
          %v1331 = vmul.f32 %v1330, %v1218
          %v1332 = vmul.f32 %v1330, %v1219
          %1335 = vrot.lane.b32.xlu0 %v1331, 127
          %v1336 = vpop.permute.xlu0 %1335
          %1337 = vrot.lane.b32.xlu0 %v1332, 127
          %v1338 = vpop.permute.xlu0 %1337
          %v1341 = vadd.f32 %v1327, %v1336
          %v1342 = vadd.f32 %v1328, %v1338
          %s1343 = sld [smem:[#allocation5 + $0x39]]
          %v1344 = vstv %s1343
          %v1345 = vmul.f32 %v1344, %v1218
          %v1346 = vmul.f32 %v1344, %v1219
          %v1347 = vmul.f32 %v1344, %v1220
          %v1351 = vrot.slane %v1345, 1
          %v1352 = vrot.slane %v1346, 1
          %v1353 = vsel %vm278, %v1351, %v1352
          %v1354 = vrot.slane %v1347, 1
          %v1355 = vsel %vm278, %v1352, %v1354
          %1356 = vrot.lane.b32.xlu0 %v1353, 127
          %v1357 = vpop.permute.xlu0 %1356
          %1358 = vrot.lane.b32.xlu0 %v1355, 127
          %v1359 = vpop.permute.xlu0 %1358
          %v1362 = vadd.f32 %v1341, %v1357
          %v1363 = vadd.f32 %v1342, %v1359
          %s1364 = sld [smem:[#allocation5 + $0x40]]
          %v1365 = vstv %s1364
          %v1366 = vmul.f32 %v1365, %v1218
          %v1367 = vmul.f32 %v1365, %v1219
          %v1368 = vmul.f32 %v1365, %v1220
          %v1372 = vrot.slane %v1366, 2
          %v1373 = vrot.slane %v1367, 2
          %v1374 = vsel %vm296, %v1372, %v1373
          %v1375 = vrot.slane %v1368, 2
          %v1376 = vsel %vm296, %v1373, %v1375
          %1377 = vrot.lane.b32.xlu0 %v1374, 127
          %v1378 = vpop.permute.xlu0 %1377
          %1379 = vrot.lane.b32.xlu0 %v1376, 127
          %v1380 = vpop.permute.xlu0 %1379
          %v1383 = vadd.f32 %v1362, %v1378
          %v1384 = vadd.f32 %v1363, %v1380
          %s1385 = sld [smem:[#allocation5 + $0x47]]
          %v1386 = vstv %s1385
          %v1387 = vmul.f32 %v1386, %v1218
          %v1388 = vmul.f32 %v1386, %v1219
          %v1389 = vmul.f32 %v1386, %v1220
          %v1393 = vrot.slane %v1387, 3
          %v1394 = vrot.slane %v1388, 3
          %v1395 = vsel %vm314, %v1393, %v1394
          %v1396 = vrot.slane %v1389, 3
          %v1397 = vsel %vm314, %v1394, %v1396
          %1398 = vrot.lane.b32.xlu0 %v1395, 127
          %v1399 = vpop.permute.xlu0 %1398
          %1400 = vrot.lane.b32.xlu0 %v1397, 127
          %v1401 = vpop.permute.xlu0 %1400
          %v1404 = vadd.f32 %v1383, %v1399
          %v1405 = vadd.f32 %v1384, %v1401
          %s1406 = sld [smem:[#allocation5 + $0x4e]]
          %v1407 = vstv %s1406
          %v1408 = vmul.f32 %v1407, %v1218
          %v1409 = vmul.f32 %v1407, %v1219
          %v1410 = vmul.f32 %v1407, %v1220
          %v1414 = vrot.slane %v1408, 4
          %v1415 = vrot.slane %v1409, 4
          %v1416 = vsel %vm332, %v1414, %v1415
          %v1417 = vrot.slane %v1410, 4
          %v1418 = vsel %vm332, %v1415, %v1417
          %1419 = vrot.lane.b32.xlu0 %v1416, 127
          %v1420 = vpop.permute.xlu0 %1419
          %1421 = vrot.lane.b32.xlu0 %v1418, 127
          %v1422 = vpop.permute.xlu0 %1421
          %v1425 = vadd.f32 %v1404, %v1420
          %v1426 = vadd.f32 %v1405, %v1422
          %s1427 = sld [smem:[#allocation5 + $0x55]]
          %v1428 = vstv %s1427
          %v1429 = vmul.f32 %v1428, %v1218
          %v1430 = vmul.f32 %v1428, %v1219
          %v1431 = vmul.f32 %v1428, %v1220
          %v1435 = vrot.slane %v1429, 5
          %v1436 = vrot.slane %v1430, 5
          %v1437 = vsel %vm350, %v1435, %v1436
          %v1438 = vrot.slane %v1431, 5
          %v1439 = vsel %vm350, %v1436, %v1438
          %1440 = vrot.lane.b32.xlu0 %v1437, 127
          %v1441 = vpop.permute.xlu0 %1440
          %1442 = vrot.lane.b32.xlu0 %v1439, 127
          %v1443 = vpop.permute.xlu0 %1442
          %v1446 = vadd.f32 %v1425, %v1441
          %v1447 = vadd.f32 %v1426, %v1443
          %s1448 = sld [smem:[#allocation5 + $0x5c]]
          %v1449 = vstv %s1448
          %v1450 = vmul.f32 %v1449, %v1218
          %v1451 = vmul.f32 %v1449, %v1219
          %v1452 = vmul.f32 %v1449, %v1220
          %v1456 = vrot.slane %v1450, 6
          %v1457 = vrot.slane %v1451, 6
          %v1458 = vsel %vm368, %v1456, %v1457
          %v1459 = vrot.slane %v1452, 6
          %v1460 = vsel %vm368, %v1457, %v1459
          %1461 = vrot.lane.b32.xlu0 %v1458, 127
          %v1462 = vpop.permute.xlu0 %1461
          %1463 = vrot.lane.b32.xlu0 %v1460, 127
          %v1464 = vpop.permute.xlu0 %1463
          %v1467 = vadd.f32 %v1446, %v1462
          %v1468 = vadd.f32 %v1447, %v1464
          %s1469 = sld [smem:[#allocation5 + $0x33]]
          %v1470 = vstv %s1469
          %v1471 = vmul.f32 %v1470, %v1218
          %v1472 = vmul.f32 %v1470, %v1219
          %1475 = vrot.lane.b32.xlu0 %v1471, 126
          %v1476 = vpop.permute.xlu0 %1475
          %1477 = vrot.lane.b32.xlu0 %v1472, 126
          %v1478 = vpop.permute.xlu0 %1477
          %v1481 = vadd.f32 %v1467, %v1476
          %v1482 = vadd.f32 %v1468, %v1478
          %s1483 = sld [smem:[#allocation5 + $0x3a]]
          %v1484 = vstv %s1483
          %v1485 = vmul.f32 %v1484, %v1218
          %v1486 = vmul.f32 %v1484, %v1219
          %v1487 = vmul.f32 %v1484, %v1220
          %v1491 = vrot.slane %v1485, 1
          %v1492 = vrot.slane %v1486, 1
          %v1493 = vsel %vm278, %v1491, %v1492
          %v1494 = vrot.slane %v1487, 1
          %v1495 = vsel %vm278, %v1492, %v1494
          %1496 = vrot.lane.b32.xlu0 %v1493, 126
          %v1497 = vpop.permute.xlu0 %1496
          %1498 = vrot.lane.b32.xlu0 %v1495, 126
          %v1499 = vpop.permute.xlu0 %1498
          %v1502 = vadd.f32 %v1481, %v1497
          %v1503 = vadd.f32 %v1482, %v1499
          %s1504 = sld [smem:[#allocation5 + $0x41]]
          %v1505 = vstv %s1504
          %v1506 = vmul.f32 %v1505, %v1218
          %v1507 = vmul.f32 %v1505, %v1219
          %v1508 = vmul.f32 %v1505, %v1220
          %v1512 = vrot.slane %v1506, 2
          %v1513 = vrot.slane %v1507, 2
          %v1514 = vsel %vm296, %v1512, %v1513
          %v1515 = vrot.slane %v1508, 2
          %v1516 = vsel %vm296, %v1513, %v1515
          %1517 = vrot.lane.b32.xlu0 %v1514, 126
          %v1518 = vpop.permute.xlu0 %1517
          %1519 = vrot.lane.b32.xlu0 %v1516, 126
          %v1520 = vpop.permute.xlu0 %1519
          %v1523 = vadd.f32 %v1502, %v1518
          %v1524 = vadd.f32 %v1503, %v1520
          %s1525 = sld [smem:[#allocation5 + $0x48]]
          %v1526 = vstv %s1525
          %v1527 = vmul.f32 %v1526, %v1218
          %v1528 = vmul.f32 %v1526, %v1219
          %v1529 = vmul.f32 %v1526, %v1220
          %v1533 = vrot.slane %v1527, 3
          %v1534 = vrot.slane %v1528, 3
          %v1535 = vsel %vm314, %v1533, %v1534
          %v1536 = vrot.slane %v1529, 3
          %v1537 = vsel %vm314, %v1534, %v1536
          %1538 = vrot.lane.b32.xlu0 %v1535, 126
          %v1539 = vpop.permute.xlu0 %1538
          %1540 = vrot.lane.b32.xlu0 %v1537, 126
          %v1541 = vpop.permute.xlu0 %1540
          %v1544 = vadd.f32 %v1523, %v1539
          %v1545 = vadd.f32 %v1524, %v1541
          %s1546 = sld [smem:[#allocation5 + $0x4f]]
          %v1547 = vstv %s1546
          %v1548 = vmul.f32 %v1547, %v1218
          %v1549 = vmul.f32 %v1547, %v1219
          %v1550 = vmul.f32 %v1547, %v1220
          %v1554 = vrot.slane %v1548, 4
          %v1555 = vrot.slane %v1549, 4
          %v1556 = vsel %vm332, %v1554, %v1555
          %v1557 = vrot.slane %v1550, 4
          %v1558 = vsel %vm332, %v1555, %v1557
          %1559 = vrot.lane.b32.xlu0 %v1556, 126
          %v1560 = vpop.permute.xlu0 %1559
          %1561 = vrot.lane.b32.xlu0 %v1558, 126
          %v1562 = vpop.permute.xlu0 %1561
          %v1565 = vadd.f32 %v1544, %v1560
          %v1566 = vadd.f32 %v1545, %v1562
          %s1567 = sld [smem:[#allocation5 + $0x56]]
          %v1568 = vstv %s1567
          %v1569 = vmul.f32 %v1568, %v1218
          %v1570 = vmul.f32 %v1568, %v1219
          %v1571 = vmul.f32 %v1568, %v1220
          %v1575 = vrot.slane %v1569, 5
          %v1576 = vrot.slane %v1570, 5
          %v1577 = vsel %vm350, %v1575, %v1576
          %v1578 = vrot.slane %v1571, 5
          %v1579 = vsel %vm350, %v1576, %v1578
          %1580 = vrot.lane.b32.xlu0 %v1577, 126
          %v1581 = vpop.permute.xlu0 %1580
          %1582 = vrot.lane.b32.xlu0 %v1579, 126
          %v1583 = vpop.permute.xlu0 %1582
          %v1586 = vadd.f32 %v1565, %v1581
          %v1587 = vadd.f32 %v1566, %v1583
          %s1588 = sld [smem:[#allocation5 + $0x5d]]
          %v1589 = vstv %s1588
          %v1590 = vmul.f32 %v1589, %v1218
          %v1591 = vmul.f32 %v1589, %v1219
          %v1592 = vmul.f32 %v1589, %v1220
          %v1596 = vrot.slane %v1590, 6
          %v1597 = vrot.slane %v1591, 6
          %v1598 = vsel %vm368, %v1596, %v1597
          %v1599 = vrot.slane %v1592, 6
          %v1600 = vsel %vm368, %v1597, %v1599
          %1601 = vrot.lane.b32.xlu0 %v1598, 126
          %v1602 = vpop.permute.xlu0 %1601
          %1603 = vrot.lane.b32.xlu0 %v1600, 126
          %v1604 = vpop.permute.xlu0 %1603
          %v1607 = vadd.f32 %v1586, %v1602
          %v1608 = vadd.f32 %v1587, %v1604
          %s1609 = sld [smem:[#allocation5 + $0x34]]
          %v1610 = vstv %s1609
          %v1611 = vmul.f32 %v1610, %v1218
          %v1612 = vmul.f32 %v1610, %v1219
          %1615 = vrot.lane.b32.xlu0 %v1611, 125
          %v1616 = vpop.permute.xlu0 %1615
          %1617 = vrot.lane.b32.xlu0 %v1612, 125
          %v1618 = vpop.permute.xlu0 %1617
          %v1621 = vadd.f32 %v1607, %v1616
          %v1622 = vadd.f32 %v1608, %v1618
          %s1623 = sld [smem:[#allocation5 + $0x3b]]
          %v1624 = vstv %s1623
          %v1625 = vmul.f32 %v1624, %v1218
          %v1626 = vmul.f32 %v1624, %v1219
          %v1627 = vmul.f32 %v1624, %v1220
          %v1631 = vrot.slane %v1625, 1
          %v1632 = vrot.slane %v1626, 1
          %v1633 = vsel %vm278, %v1631, %v1632
          %v1634 = vrot.slane %v1627, 1
          %v1635 = vsel %vm278, %v1632, %v1634
          %1636 = vrot.lane.b32.xlu0 %v1633, 125
          %v1637 = vpop.permute.xlu0 %1636
          %1638 = vrot.lane.b32.xlu0 %v1635, 125
          %v1639 = vpop.permute.xlu0 %1638
          %v1642 = vadd.f32 %v1621, %v1637
          %v1643 = vadd.f32 %v1622, %v1639
          %s1644 = sld [smem:[#allocation5 + $0x42]]
          %v1645 = vstv %s1644
          %v1646 = vmul.f32 %v1645, %v1218
          %v1647 = vmul.f32 %v1645, %v1219
          %v1648 = vmul.f32 %v1645, %v1220
          %v1652 = vrot.slane %v1646, 2
          %v1653 = vrot.slane %v1647, 2
          %v1654 = vsel %vm296, %v1652, %v1653
          %v1655 = vrot.slane %v1648, 2
          %v1656 = vsel %vm296, %v1653, %v1655
          %1657 = vrot.lane.b32.xlu0 %v1654, 125
          %v1658 = vpop.permute.xlu0 %1657
          %1659 = vrot.lane.b32.xlu0 %v1656, 125
          %v1660 = vpop.permute.xlu0 %1659
          %v1663 = vadd.f32 %v1642, %v1658
          %v1664 = vadd.f32 %v1643, %v1660
          %s1665 = sld [smem:[#allocation5 + $0x49]]
          %v1666 = vstv %s1665
          %v1667 = vmul.f32 %v1666, %v1218
          %v1668 = vmul.f32 %v1666, %v1219
          %v1669 = vmul.f32 %v1666, %v1220
          %v1673 = vrot.slane %v1667, 3
          %v1674 = vrot.slane %v1668, 3
          %v1675 = vsel %vm314, %v1673, %v1674
          %v1676 = vrot.slane %v1669, 3
          %v1677 = vsel %vm314, %v1674, %v1676
          %1678 = vrot.lane.b32.xlu0 %v1675, 125
          %v1679 = vpop.permute.xlu0 %1678
          %1680 = vrot.lane.b32.xlu0 %v1677, 125
          %v1681 = vpop.permute.xlu0 %1680
          %v1684 = vadd.f32 %v1663, %v1679
          %v1685 = vadd.f32 %v1664, %v1681
          %s1686 = sld [smem:[#allocation5 + $0x50]]
          %v1687 = vstv %s1686
          %v1688 = vmul.f32 %v1687, %v1218
          %v1689 = vmul.f32 %v1687, %v1219
          %v1690 = vmul.f32 %v1687, %v1220
          %v1694 = vrot.slane %v1688, 4
          %v1695 = vrot.slane %v1689, 4
          %v1696 = vsel %vm332, %v1694, %v1695
          %v1697 = vrot.slane %v1690, 4
          %v1698 = vsel %vm332, %v1695, %v1697
          %1699 = vrot.lane.b32.xlu0 %v1696, 125
          %v1700 = vpop.permute.xlu0 %1699
          %1701 = vrot.lane.b32.xlu0 %v1698, 125
          %v1702 = vpop.permute.xlu0 %1701
          %v1705 = vadd.f32 %v1684, %v1700
          %v1706 = vadd.f32 %v1685, %v1702
          %s1707 = sld [smem:[#allocation5 + $0x57]]
          %v1708 = vstv %s1707
          %v1709 = vmul.f32 %v1708, %v1218
          %v1710 = vmul.f32 %v1708, %v1219
          %v1711 = vmul.f32 %v1708, %v1220
          %v1715 = vrot.slane %v1709, 5
          %v1716 = vrot.slane %v1710, 5
          %v1717 = vsel %vm350, %v1715, %v1716
          %v1718 = vrot.slane %v1711, 5
          %v1719 = vsel %vm350, %v1716, %v1718
          %1720 = vrot.lane.b32.xlu0 %v1717, 125
          %v1721 = vpop.permute.xlu0 %1720
          %1722 = vrot.lane.b32.xlu0 %v1719, 125
          %v1723 = vpop.permute.xlu0 %1722
          %v1726 = vadd.f32 %v1705, %v1721
          %v1727 = vadd.f32 %v1706, %v1723
          %s1728 = sld [smem:[#allocation5 + $0x5e]]
          %v1729 = vstv %s1728
          %v1730 = vmul.f32 %v1729, %v1218
          %v1731 = vmul.f32 %v1729, %v1219
          %v1732 = vmul.f32 %v1729, %v1220
          %v1736 = vrot.slane %v1730, 6
          %v1737 = vrot.slane %v1731, 6
          %v1738 = vsel %vm368, %v1736, %v1737
          %v1739 = vrot.slane %v1732, 6
          %v1740 = vsel %vm368, %v1737, %v1739
          %1741 = vrot.lane.b32.xlu0 %v1738, 125
          %v1742 = vpop.permute.xlu0 %1741
          %1743 = vrot.lane.b32.xlu0 %v1740, 125
          %v1744 = vpop.permute.xlu0 %1743
          %v1747 = vadd.f32 %v1726, %v1742
          %v1748 = vadd.f32 %v1727, %v1744
          %s1749 = sld [smem:[#allocation5 + $0x35]]
          %v1750 = vstv %s1749
          %v1751 = vmul.f32 %v1750, %v1218
          %v1752 = vmul.f32 %v1750, %v1219
          %1755 = vrot.lane.b32.xlu0 %v1751, 124
          %v1756 = vpop.permute.xlu0 %1755
          %1757 = vrot.lane.b32.xlu0 %v1752, 124
          %v1758 = vpop.permute.xlu0 %1757
          %v1761 = vadd.f32 %v1747, %v1756
          %v1762 = vadd.f32 %v1748, %v1758
          %s1763 = sld [smem:[#allocation5 + $0x3c]]
          %v1764 = vstv %s1763
          %v1765 = vmul.f32 %v1764, %v1218
          %v1766 = vmul.f32 %v1764, %v1219
          %v1767 = vmul.f32 %v1764, %v1220
          %v1771 = vrot.slane %v1765, 1
          %v1772 = vrot.slane %v1766, 1
          %v1773 = vsel %vm278, %v1771, %v1772
          %v1774 = vrot.slane %v1767, 1
          %v1775 = vsel %vm278, %v1772, %v1774
          %1776 = vrot.lane.b32.xlu0 %v1773, 124
          %v1777 = vpop.permute.xlu0 %1776
          %1778 = vrot.lane.b32.xlu0 %v1775, 124
          %v1779 = vpop.permute.xlu0 %1778
          %v1782 = vadd.f32 %v1761, %v1777
          %v1783 = vadd.f32 %v1762, %v1779
          %s1784 = sld [smem:[#allocation5 + $0x43]]
          %v1785 = vstv %s1784
          %v1786 = vmul.f32 %v1785, %v1218
          %v1787 = vmul.f32 %v1785, %v1219
          %v1788 = vmul.f32 %v1785, %v1220
          %v1792 = vrot.slane %v1786, 2
          %v1793 = vrot.slane %v1787, 2
          %v1794 = vsel %vm296, %v1792, %v1793
          %v1795 = vrot.slane %v1788, 2
          %v1796 = vsel %vm296, %v1793, %v1795
          %1797 = vrot.lane.b32.xlu0 %v1794, 124
          %v1798 = vpop.permute.xlu0 %1797
          %1799 = vrot.lane.b32.xlu0 %v1796, 124
          %v1800 = vpop.permute.xlu0 %1799
          %v1803 = vadd.f32 %v1782, %v1798
          %v1804 = vadd.f32 %v1783, %v1800
          %s1805 = sld [smem:[#allocation5 + $0x4a]]
          %v1806 = vstv %s1805
          %v1807 = vmul.f32 %v1806, %v1218
          %v1808 = vmul.f32 %v1806, %v1219
          %v1809 = vmul.f32 %v1806, %v1220
          %v1813 = vrot.slane %v1807, 3
          %v1814 = vrot.slane %v1808, 3
          %v1815 = vsel %vm314, %v1813, %v1814
          %v1816 = vrot.slane %v1809, 3
          %v1817 = vsel %vm314, %v1814, %v1816
          %1818 = vrot.lane.b32.xlu0 %v1815, 124
          %v1819 = vpop.permute.xlu0 %1818
          %1820 = vrot.lane.b32.xlu0 %v1817, 124
          %v1821 = vpop.permute.xlu0 %1820
          %v1824 = vadd.f32 %v1803, %v1819
          %v1825 = vadd.f32 %v1804, %v1821
          %s1826 = sld [smem:[#allocation5 + $0x51]]
          %v1827 = vstv %s1826
          %v1828 = vmul.f32 %v1827, %v1218
          %v1829 = vmul.f32 %v1827, %v1219
          %v1830 = vmul.f32 %v1827, %v1220
          %v1834 = vrot.slane %v1828, 4
          %v1835 = vrot.slane %v1829, 4
          %v1836 = vsel %vm332, %v1834, %v1835
          %v1837 = vrot.slane %v1830, 4
          %v1838 = vsel %vm332, %v1835, %v1837
          %1839 = vrot.lane.b32.xlu0 %v1836, 124
          %v1840 = vpop.permute.xlu0 %1839
          %1841 = vrot.lane.b32.xlu0 %v1838, 124
          %v1842 = vpop.permute.xlu0 %1841
          %v1845 = vadd.f32 %v1824, %v1840
          %v1846 = vadd.f32 %v1825, %v1842
          %s1847 = sld [smem:[#allocation5 + $0x58]]
          %v1848 = vstv %s1847
          %v1849 = vmul.f32 %v1848, %v1218
          %v1850 = vmul.f32 %v1848, %v1219
          %v1851 = vmul.f32 %v1848, %v1220
          %v1855 = vrot.slane %v1849, 5
          %v1856 = vrot.slane %v1850, 5
          %v1857 = vsel %vm350, %v1855, %v1856
          %v1858 = vrot.slane %v1851, 5
          %v1859 = vsel %vm350, %v1856, %v1858
          %1860 = vrot.lane.b32.xlu0 %v1857, 124
          %v1861 = vpop.permute.xlu0 %1860
          %1862 = vrot.lane.b32.xlu0 %v1859, 124
          %v1863 = vpop.permute.xlu0 %1862
          %v1866 = vadd.f32 %v1845, %v1861
          %v1867 = vadd.f32 %v1846, %v1863
          %s1868 = sld [smem:[#allocation5 + $0x5f]]
          %v1869 = vstv %s1868
          %v1870 = vmul.f32 %v1869, %v1218
          %v1871 = vmul.f32 %v1869, %v1219
          %v1872 = vmul.f32 %v1869, %v1220
          %v1876 = vrot.slane %v1870, 6
          %v1877 = vrot.slane %v1871, 6
          %v1878 = vsel %vm368, %v1876, %v1877
          %v1879 = vrot.slane %v1872, 6
          %v1880 = vsel %vm368, %v1877, %v1879
          %1881 = vrot.lane.b32.xlu0 %v1878, 124
          %v1882 = vpop.permute.xlu0 %1881
          %1883 = vrot.lane.b32.xlu0 %v1880, 124
          %v1884 = vpop.permute.xlu0 %1883
          %v1887 = vadd.f32 %v1866, %v1882
          %v1888 = vadd.f32 %v1867, %v1884
          %s1889 = sld [smem:[#allocation5 + $0x36]]
          %v1890 = vstv %s1889
          %v1891 = vmul.f32 %v1890, %v1218
          %v1892 = vmul.f32 %v1890, %v1219
          %1895 = vrot.lane.b32.xlu0 %v1891, 123
          %v1896 = vpop.permute.xlu0 %1895
          %1897 = vrot.lane.b32.xlu0 %v1892, 123
          %v1898 = vpop.permute.xlu0 %1897
          %v1901 = vadd.f32 %v1887, %v1896
          %v1902 = vadd.f32 %v1888, %v1898
          %s1903 = sld [smem:[#allocation5 + $0x3d]]
          %v1904 = vstv %s1903
          %v1905 = vmul.f32 %v1904, %v1218
          %v1906 = vmul.f32 %v1904, %v1219
          %v1907 = vmul.f32 %v1904, %v1220
          %v1911 = vrot.slane %v1905, 1
          %v1912 = vrot.slane %v1906, 1
          %v1913 = vsel %vm278, %v1911, %v1912
          %v1914 = vrot.slane %v1907, 1
          %v1915 = vsel %vm278, %v1912, %v1914
          %1916 = vrot.lane.b32.xlu0 %v1913, 123
          %v1917 = vpop.permute.xlu0 %1916
          %1918 = vrot.lane.b32.xlu0 %v1915, 123
          %v1919 = vpop.permute.xlu0 %1918
          %v1922 = vadd.f32 %v1901, %v1917
          %v1923 = vadd.f32 %v1902, %v1919
          %s1924 = sld [smem:[#allocation5 + $0x44]]
          %v1925 = vstv %s1924
          %v1926 = vmul.f32 %v1925, %v1218
          %v1927 = vmul.f32 %v1925, %v1219
          %v1928 = vmul.f32 %v1925, %v1220
          %v1932 = vrot.slane %v1926, 2
          %v1933 = vrot.slane %v1927, 2
          %v1934 = vsel %vm296, %v1932, %v1933
          %v1935 = vrot.slane %v1928, 2
          %v1936 = vsel %vm296, %v1933, %v1935
          %1937 = vrot.lane.b32.xlu0 %v1934, 123
          %v1938 = vpop.permute.xlu0 %1937
          %1939 = vrot.lane.b32.xlu0 %v1936, 123
          %v1940 = vpop.permute.xlu0 %1939
          %v1943 = vadd.f32 %v1922, %v1938
          %v1944 = vadd.f32 %v1923, %v1940
          %s1945 = sld [smem:[#allocation5 + $0x4b]]
          %v1946 = vstv %s1945
          %v1947 = vmul.f32 %v1946, %v1218
          %v1948 = vmul.f32 %v1946, %v1219
          %v1949 = vmul.f32 %v1946, %v1220
          %v1953 = vrot.slane %v1947, 3
          %v1954 = vrot.slane %v1948, 3
          %v1955 = vsel %vm314, %v1953, %v1954
          %v1956 = vrot.slane %v1949, 3
          %v1957 = vsel %vm314, %v1954, %v1956
          %1958 = vrot.lane.b32.xlu0 %v1955, 123
          %v1959 = vpop.permute.xlu0 %1958
          %1960 = vrot.lane.b32.xlu0 %v1957, 123
          %v1961 = vpop.permute.xlu0 %1960
          %v1964 = vadd.f32 %v1943, %v1959
          %v1965 = vadd.f32 %v1944, %v1961
          %s1966 = sld [smem:[#allocation5 + $0x52]]
          %v1967 = vstv %s1966
          %v1968 = vmul.f32 %v1967, %v1218
          %v1969 = vmul.f32 %v1967, %v1219
          %v1970 = vmul.f32 %v1967, %v1220
          %v1974 = vrot.slane %v1968, 4
          %v1975 = vrot.slane %v1969, 4
          %v1976 = vsel %vm332, %v1974, %v1975
          %v1977 = vrot.slane %v1970, 4
          %v1978 = vsel %vm332, %v1975, %v1977
          %1979 = vrot.lane.b32.xlu0 %v1976, 123
          %v1980 = vpop.permute.xlu0 %1979
          %1981 = vrot.lane.b32.xlu0 %v1978, 123
          %v1982 = vpop.permute.xlu0 %1981
          %v1985 = vadd.f32 %v1964, %v1980
          %v1986 = vadd.f32 %v1965, %v1982
          %s1987 = sld [smem:[#allocation5 + $0x59]]
          %v1988 = vstv %s1987
          %v1989 = vmul.f32 %v1988, %v1218
          %v1990 = vmul.f32 %v1988, %v1219
          %v1991 = vmul.f32 %v1988, %v1220
          %v1995 = vrot.slane %v1989, 5
          %v1996 = vrot.slane %v1990, 5
          %v1997 = vsel %vm350, %v1995, %v1996
          %v1998 = vrot.slane %v1991, 5
          %v1999 = vsel %vm350, %v1996, %v1998
          %2000 = vrot.lane.b32.xlu0 %v1997, 123
          %v2001 = vpop.permute.xlu0 %2000
          %2002 = vrot.lane.b32.xlu0 %v1999, 123
          %v2003 = vpop.permute.xlu0 %2002
          %v2006 = vadd.f32 %v1985, %v2001
          %v2007 = vadd.f32 %v1986, %v2003
          %s2008 = sld [smem:[#allocation5 + $0x60]]
          %v2009 = vstv %s2008
          %v2010 = vmul.f32 %v2009, %v1218
          %v2011 = vmul.f32 %v2009, %v1219
          %v2012 = vmul.f32 %v2009, %v1220
          %v2016 = vrot.slane %v2010, 6
          %v2017 = vrot.slane %v2011, 6
          %v2018 = vsel %vm368, %v2016, %v2017
          %v2019 = vrot.slane %v2012, 6
          %v2020 = vsel %vm368, %v2017, %v2019
          %2021 = vrot.lane.b32.xlu0 %v2018, 123
          %v2022 = vpop.permute.xlu0 %2021
          %2023 = vrot.lane.b32.xlu0 %v2020, 123
          %v2024 = vpop.permute.xlu0 %2023
          %v2027 = vadd.f32 %v2006, %v2022
          %v2028 = vadd.f32 %v2007, %v2024
          %s2029 = sld [smem:[#allocation5 + $0x37]]
          %v2030 = vstv %s2029
          %v2031 = vmul.f32 %v2030, %v1218
          %v2032 = vmul.f32 %v2030, %v1219
          %2035 = vrot.lane.b32.xlu0 %v2031, 122
          %v2036 = vpop.permute.xlu0 %2035
          %2037 = vrot.lane.b32.xlu0 %v2032, 122
          %v2038 = vpop.permute.xlu0 %2037
          %v2041 = vadd.f32 %v2027, %v2036
          %v2042 = vadd.f32 %v2028, %v2038
          %s2043 = sld [smem:[#allocation5 + $0x3e]]
          %v2044 = vstv %s2043
          %v2045 = vmul.f32 %v2044, %v1218
          %v2046 = vmul.f32 %v2044, %v1219
          %v2047 = vmul.f32 %v2044, %v1220
          %v2051 = vrot.slane %v2045, 1
          %v2052 = vrot.slane %v2046, 1
          %v2053 = vsel %vm278, %v2051, %v2052
          %v2054 = vrot.slane %v2047, 1
          %v2055 = vsel %vm278, %v2052, %v2054
          %2056 = vrot.lane.b32.xlu0 %v2053, 122
          %v2057 = vpop.permute.xlu0 %2056
          %2058 = vrot.lane.b32.xlu0 %v2055, 122
          %v2059 = vpop.permute.xlu0 %2058
          %v2062 = vadd.f32 %v2041, %v2057
          %v2063 = vadd.f32 %v2042, %v2059
          %s2064 = sld [smem:[#allocation5 + $0x45]]
          %v2065 = vstv %s2064
          %v2066 = vmul.f32 %v2065, %v1218
          %v2067 = vmul.f32 %v2065, %v1219
          %v2068 = vmul.f32 %v2065, %v1220
          %v2072 = vrot.slane %v2066, 2
          %v2073 = vrot.slane %v2067, 2
          %v2074 = vsel %vm296, %v2072, %v2073
          %v2075 = vrot.slane %v2068, 2
          %v2076 = vsel %vm296, %v2073, %v2075
          %2077 = vrot.lane.b32.xlu0 %v2074, 122
          %v2078 = vpop.permute.xlu0 %2077
          %2079 = vrot.lane.b32.xlu0 %v2076, 122
          %v2080 = vpop.permute.xlu0 %2079
          %v2083 = vadd.f32 %v2062, %v2078
          %v2084 = vadd.f32 %v2063, %v2080
          %s2085 = sld [smem:[#allocation5 + $0x4c]]
          %v2086 = vstv %s2085
          %v2087 = vmul.f32 %v2086, %v1218
          %v2088 = vmul.f32 %v2086, %v1219
          %v2089 = vmul.f32 %v2086, %v1220
          %v2093 = vrot.slane %v2087, 3
          %v2094 = vrot.slane %v2088, 3
          %v2095 = vsel %vm314, %v2093, %v2094
          %v2096 = vrot.slane %v2089, 3
          %v2097 = vsel %vm314, %v2094, %v2096
          %2098 = vrot.lane.b32.xlu0 %v2095, 122
          %v2099 = vpop.permute.xlu0 %2098
          %2100 = vrot.lane.b32.xlu0 %v2097, 122
          %v2101 = vpop.permute.xlu0 %2100
          %v2104 = vadd.f32 %v2083, %v2099
          %v2105 = vadd.f32 %v2084, %v2101
          %s2106 = sld [smem:[#allocation5 + $0x53]]
          %v2107 = vstv %s2106
          %v2108 = vmul.f32 %v2107, %v1218
          %v2109 = vmul.f32 %v2107, %v1219
          %v2110 = vmul.f32 %v2107, %v1220
          %v2114 = vrot.slane %v2108, 4
          %v2115 = vrot.slane %v2109, 4
          %v2116 = vsel %vm332, %v2114, %v2115
          %v2117 = vrot.slane %v2110, 4
          %v2118 = vsel %vm332, %v2115, %v2117
          %2119 = vrot.lane.b32.xlu0 %v2116, 122
          %v2120 = vpop.permute.xlu0 %2119
          %2121 = vrot.lane.b32.xlu0 %v2118, 122
          %v2122 = vpop.permute.xlu0 %2121
          %v2125 = vadd.f32 %v2104, %v2120
          %v2126 = vadd.f32 %v2105, %v2122
          %s2127 = sld [smem:[#allocation5 + $0x5a]]
          %v2128 = vstv %s2127
          %v2129 = vmul.f32 %v2128, %v1218
          %v2130 = vmul.f32 %v2128, %v1219
          %v2131 = vmul.f32 %v2128, %v1220
          %v2135 = vrot.slane %v2129, 5
          %v2136 = vrot.slane %v2130, 5
          %v2137 = vsel %vm350, %v2135, %v2136
          %v2138 = vrot.slane %v2131, 5
          %v2139 = vsel %vm350, %v2136, %v2138
          %2140 = vrot.lane.b32.xlu0 %v2137, 122
          %v2141 = vpop.permute.xlu0 %2140
          %2142 = vrot.lane.b32.xlu0 %v2139, 122
          %v2143 = vpop.permute.xlu0 %2142
          %v2146 = vadd.f32 %v2125, %v2141
          %v2147 = vadd.f32 %v2126, %v2143
          %s2148 = sld [smem:[#allocation5 + $0x61]]
          %v2149 = vstv %s2148
          %v2150 = vmul.f32 %v2149, %v1218
          %v2151 = vmul.f32 %v2149, %v1219
          %v2152 = vmul.f32 %v2149, %v1220
          %v2156 = vrot.slane %v2150, 6
          %v2157 = vrot.slane %v2151, 6
          %v2158 = vsel %vm368, %v2156, %v2157
          %v2159 = vrot.slane %v2152, 6
          %v2160 = vsel %vm368, %v2157, %v2159
          %2161 = vrot.lane.b32.xlu0 %v2158, 122
          %v2162 = vpop.permute.xlu0 %2161
          %2163 = vrot.lane.b32.xlu0 %v2160, 122
          %v2164 = vpop.permute.xlu0 %2163
          %v2167 = vadd.f32 %v2146, %v2162
          %v2168 = vadd.f32 %v2147, %v2164
          %v2169 = vxor.u32 %v2167, 2147483648
          %v2170 = vxor.u32 %v2168, 2147483648
          %v2171 = vmul.f32 %v2169, 1.442695
          %v2172 = vpow.pop %v2171
          %v2173 = vmul.f32 %v2170, 1.442695
          %v2174 = vpow.pop %v2173
          %v2175 = vadd.f32 %v2172, 1.0
          %v2176 = vadd.f32 %v2174, 1.0
          %v2177 = vrcp.pop %v2175
          %v2178 = vmul.f32 1.0, %v2177
          %v2179 = vrcp.pop %v2176
          %v2180 = vmul.f32 1.0, %v2179
          %vm2181 = vcmask 130048
          %2182 = vst.msk [vmem:[%s190] sm:$0xff] %vm2181, %v2178
          %2183 = vst.msk [vmem:[%s190 + $0x8] sm:$0xff] %vm2181, %v2180
        $region51: #{tpu_custom_call.1} parent=27 // pred_fallthru
          _
        %s2184 = sand.u32 %s89, 1
        %s2185 = scalar_lea.sflag [#allocation7], %s2184
        %s2186 = sand.u32 %s89, 1
        %s2187 = smul.addr %s2186, 16
        %s2188 = scalar_lea.vmem [#allocation10], %s2187
        // Predicated region
        $region52: #{tpu_custom_call.1} parent=27 // pred_check
          %p2189 = pneg %p99
        $region53: #{tpu_custom_call.1} parent=27 // pred_check_branch
          %2191 = sbr.rel (%p2189) target = $region55
        $region54: #{tpu_custom_call.1} parent=27 // pred_region
          %s2193 = ssub.s32 256, 256
          %2194 = vsyncadd %s2185, %s2193
          %s2195 = smul.addr %s24, 2
          %s2196 = smul.addr %s2195, 128
          %s2197 = scalar_lea.hbm %s2, %s2196
          %s2198 = sshll.u32 %s2188, 4
          %s2199 = int_to_ptr.vmem [resolvable:$true] %s2198
          %2204 = dma.vmem_to_hbm [thread:$0]  %s2199, 256, %s2197, %s2185, 128, 128, 8
        $region55: #{tpu_custom_call.1} parent=27 // pred_fallthru
          _
      $region28: #{tpu_custom_call.1} parent=5 // pred_fallthru
        _
      %p2205 = scmp.le.s32.totalorder 2, %s15
      // Predicated region
      $region56: #{tpu_custom_call.1} parent=5 // pred_check
        %p2206 = pneg %p2205
      $region57: #{tpu_custom_call.1} parent=5 // pred_check_branch
        %2208 = sbr.rel (%p2206) target = $region59
      $region58: #{tpu_custom_call.1} parent=5 // pred_region
        %s2209 = ssub.s32 %s15, 2
        // Predicated region
        $region60: #{tpu_custom_call.1} parent=58 // pred_check
          %p2210 = pneg %p105
        $region61: #{tpu_custom_call.1} parent=58 // pred_check_branch
          %2212 = sbr.rel (%p2210) target = $region63
        $region62: #{tpu_custom_call.1} parent=58 // pred_region
          %s2213 = sand.u32 %s90, 1
          %s2214 = scalar_lea.sflag [#allocation7], %s2213
          %s2215 = sand.u32 %s90, 1
          %s2216 = smul.addr %s2215, 16
          %s2217 = scalar_lea.vmem [#allocation10], %s2216
          %2218 = dma.done %s2214, 256
        $region63: #{tpu_custom_call.1} parent=58 // pred_fallthru
          _
      $region59: #{tpu_custom_call.1} parent=5 // pred_fallthru
        _
    $region6: #{tpu_custom_call.1} parent=1 // loop_footer
      %s19 = sadd.s32 1, %s15
    $region7: #{tpu_custom_call.1} parent=1 // loop_footer_branch
      %14 = sbr.rel target = $region3
    $region8: #{tpu_custom_call.1} parent=1 // loop_exit
      _
    %2219 = vsyncpa [#allocation6], 1
    %s2220 = scalar_lea.sflag [#allocation6], 1
    %2221 = vsyncpa %s2220, 1
    %2222 = vsyncpa [#allocation7], 1
    %s2223 = scalar_lea.sflag [#allocation7], 1
    %2224 = vsyncpa %s2223, 1
    %2225 = vsyncpa [#allocation8], 1
    %s2226 = scalar_lea.sflag [#allocation8], 1
    %2227 = vsyncpa %s2226, 1

</llo_original>
